<compile_context>
chip_gen: v5e
topology: v5e:2x2
jax: 0.10.0
libtpu: 0.0.40
codegen_flags: <defaults>
</compile_context>

<pallas_src>
import math
from functools import partial

import jax
import jax.numpy as jnp
from jax.experimental import pallas as pl
from jax.experimental.pallas import tpu as pltpu

EPS = 1e-6


# ---------------------------------------------------------------------------
# shared math helpers
# ---------------------------------------------------------------------------
def _gelu_exact(v):
    # nn.GELU() default is the exact (erf) formulation.
    return 0.5 * v * (1.0 + jax.lax.erf(v * (1.0 / math.sqrt(2.0))))


def _ln_channels(v, w, b):
    """channels_first LayerNorm with channels on the sublane (row) axis.

    v: (Cn, L), w/b: (Cn, 1). Biased variance, eps inside the sqrt, rsqrt
    instead of divide (EUP op off the VALU path)."""
    u = jnp.mean(v, axis=0, keepdims=True)            # (1, L) sublane reduce
    d = v - u
    s = jnp.mean(d * d, axis=0, keepdims=True)        # (1, L)
    return d * jax.lax.rsqrt(s + EPS) * w + b


def _dw3x3_rolls(y, w9, b, mask9, W):
    """Depthwise 3x3 conv (zero pad=1) on channels-first flattened data.

    y:     (Cn, L) with L = H*W, spatial flattened onto lanes
    w9:    (Cn, 9) per-channel taps, tap index t = kh*3 + kw
    b:     (Cn, 1)
    mask9: (9, L)  0/1 validity mask per tap (precomputed in the wrapper)

    Each tap is a lane rotation of the flattened image (XLU) + two broadcasted
    multiplies; wrapped / out-of-bounds contributions are zeroed by mask9.
    """
    L = y.shape[1]
    acc = y * w9[:, 4:5]                               # center tap: no shift, no mask
    for kh in range(3):
        for kw in range(3):
            t = kh * 3 + kw
            if t == 4:
                continue
            d = (kh - 1) * W + (kw - 1)                # flattened source offset
            shifted = pltpu.roll(y, shift=(-d) % L, axis=1)
            acc = acc + (shifted * mask9[t:t + 1, :]) * w9[:, t:t + 1]
    return acc + b


# ---------------------------------------------------------------------------
# Pallas kernel: one batch element per grid step, lane-dense (Cin, H*W) tile
# ---------------------------------------------------------------------------
def ghpa_kernel(x_ref, attn_ref, mask9_ref,
                n1w_ref, n1b_ref, n2w_ref, n2b_ref,
                dw1w_ref, dw1b_ref, dw2w_ref, dw2b_ref,
                lddw_w_ref, lddw_b_ref, ldpw_w_ref, ldpw_b_ref,
                out_ref, *, C, H, W):
    x = x_ref[0]                                       # (Cin, L) f32, lane-dense
    mask9 = mask9_ref[...]                             # (9, L)

    # ---- norm1 (channels_first LN over the sublane/channel axis) ----
    xn = _ln_channels(x, n1w_ref[...], n1b_ref[...])

    # ---- Hadamard products for groups 1..3 in one fused multiply ----
    x123 = xn[0:3 * C, :] * attn_ref[...]              # (3C, L) * (3C, L)
    x4 = xn[3 * C:4 * C, :]                            # (C, L)

    # ---- dw branch: 1x1 conv (MXU) -> GELU -> depthwise 3x3 (rolls) ----
    y = jnp.dot(dw1w_ref[...], x4,
                preferred_element_type=jnp.float32) + dw1b_ref[...]
    y = _gelu_exact(y)
    x4 = _dw3x3_rolls(y, dw2w_ref[...], dw2b_ref[...], mask9, W)

    # ---- concat (sublane-aligned, stays in registers/VMEM values) + norm2 ----
    xc = _ln_channels(jnp.concatenate([x123, x4], axis=0),
                      n2w_ref[...], n2b_ref[...])

    # ---- ldw: depthwise 3x3 -> GELU -> 1x1 (Cin -> Cout, MXU) ----
    z = _gelu_exact(_dw3x3_rolls(xc, lddw_w_ref[...], lddw_b_ref[...], mask9, W))
    z = jnp.dot(ldpw_w_ref[...], z,
                preferred_element_type=jnp.float32) + ldpw_b_ref[...]
    out_ref[0] = z.astype(out_ref.dtype)               # lane-dense (Cout, L) store


# ---------------------------------------------------------------------------
# parameter-only preprocessing (plain JAX glue): bilinear interp + tiny convs
# ---------------------------------------------------------------------------
def _bilinear_align_corners(img, out_h, out_w):
    """img: (C, Hin, Win) -> (C, out_h, out_w); mode='bilinear', align_corners=True."""
    _, Hin, Win = img.shape

    def coords(n_in, n_out):
        if n_out == 1 or n_in == 1:
            return jnp.zeros((n_out,), jnp.float32)
        return jnp.arange(n_out, dtype=jnp.float32) * ((n_in - 1) / (n_out - 1))

    ys, xs = coords(Hin, out_h), coords(Win, out_w)
    y0 = jnp.floor(ys).astype(jnp.int32)
    x0 = jnp.floor(xs).astype(jnp.int32)
    y1 = jnp.minimum(y0 + 1, Hin - 1)
    x1 = jnp.minimum(x0 + 1, Win - 1)
    wy = (ys - y0.astype(jnp.float32))[None, :, None]
    wx = (xs - x0.astype(jnp.float32))[None, None, :]
    top, bot = img[:, y0, :], img[:, y1, :]
    v00, v01 = top[:, :, x0], top[:, :, x1]
    v10, v11 = bot[:, :, x0], bot[:, :, x1]
    return (v00 * (1 - wy) * (1 - wx) + v01 * (1 - wy) * wx
            + v10 * wy * (1 - wx) + v11 * wy * wx)


def _dw3x3_chw(p, w, b):
    """Depthwise 3x3 conv, pad=1. p:(C,H,W), w:(3,3,C), b:(C,)."""
    _, H, W = p.shape
    pp = jnp.pad(p, ((0, 0), (1, 1), (1, 1)))
    acc = jnp.zeros_like(p)
    for kh in range(3):
        for kw in range(3):
            acc = acc + pp[:, kh:kh + H, kw:kw + W] * w[kh, kw, :][:, None, None]
    return acc + b[:, None, None]


def _dw3_cl(p, w, b):
    """Depthwise 1D conv k=3, pad=1. p:(C,L), w:(3,C), b:(C,)."""
    _, L = p.shape
    pp = jnp.pad(p, ((0, 0), (1, 1)))
    acc = jnp.zeros_like(p)
    for k in range(3):
        acc = acc + pp[:, k:k + L] * w[k, :][:, None]
    return acc + b[:, None]


def compute_attn_maps(p, H, W):
    """Returns channels-first maps: attn_xy (C,H,W), attn_zx (C,H), attn_zy (C,W)."""
    C = p['conv_xy_pw_w'].shape[0]

    # xy branch: interp (1,C,gx,gy) -> (C,H,W), depthwise 3x3 -> GELU -> 1x1
    a = _bilinear_align_corners(p['params_xy'][0], H, W)
    a = _gelu_exact(_dw3x3_chw(a, p['conv_xy_dw_w'], p['conv_xy_dw_b']))
    attn_xy = jnp.einsum('io,ihw->ohw', p['conv_xy_pw_w'], a) + p['conv_xy_pw_b'][:, None, None]

    # zx branch: interp (1,1,C,gx) -> (C,H), depthwise conv1d -> GELU -> 1x1
    a = _bilinear_align_corners(p['params_zx'][0], C, H)[0]
    a = _gelu_exact(_dw3_cl(a, p['conv_zx_dw_w'], p['conv_zx_dw_b']))
    attn_zx = jnp.einsum('io,il->ol', p['conv_zx_pw_w'], a) + p['conv_zx_pw_b'][:, None]

    # zy branch: interp (1,1,C,gy) -> (C,W), depthwise conv1d -> GELU -> 1x1
    a = _bilinear_align_corners(p['params_zy'][0], C, W)[0]
    a = _gelu_exact(_dw3_cl(a, p['conv_zy_dw_w'], p['conv_zy_dw_b']))
    attn_zy = jnp.einsum('io,il->ol', p['conv_zy_pw_w'], a) + p['conv_zy_pw_b'][:, None]
    return attn_xy, attn_zx, attn_zy


# ---------------------------------------------------------------------------
# deterministic parameter init (shapes from the PyTorch __init__)
# ---------------------------------------------------------------------------
def init_params(key, dim_in, dim_out, gx=8, gy=8):
    C = dim_in // 4
    ks = jax.random.split(key, 20)

    def u(k, shape, fan_in):
        bnd = 1.0 / math.sqrt(fan_in)
        return jax.random.uniform(k, shape, jnp.float32, -bnd, bnd)

    return {
        'params_xy': jnp.ones((1, C, gx, gy), jnp.float32),
        'conv_xy_dw_w': u(ks[0], (3, 3, C), 9), 'conv_xy_dw_b': u(ks[1], (C,), 9),
        'conv_xy_pw_w': u(ks[2], (C, C), C),    'conv_xy_pw_b': u(ks[3], (C,), C),
        'params_zx': jnp.ones((1, 1, C, gx), jnp.float32),
        'conv_zx_dw_w': u(ks[4], (3, C), 3),    'conv_zx_dw_b': u(ks[5], (C,), 3),
        'conv_zx_pw_w': u(ks[6], (C, C), C),    'conv_zx_pw_b': u(ks[7], (C,), C),
        'params_zy': jnp.ones((1, 1, C, gy), jnp.float32),
        'conv_zy_dw_w': u(ks[8], (3, C), 3),    'conv_zy_dw_b': u(ks[9], (C,), 3),
        'conv_zy_pw_w': u(ks[10], (C, C), C),   'conv_zy_pw_b': u(ks[11], (C,), C),
        'dw_pw_w': u(ks[12], (C, C), C),        'dw_pw_b': u(ks[13], (C,), C),
        'dw_dw_w': u(ks[14], (3, 3, C), 9),     'dw_dw_b': u(ks[15], (C,), 9),
        'norm1_w': jnp.ones((dim_in,), jnp.float32), 'norm1_b': jnp.zeros((dim_in,), jnp.float32),
        'norm2_w': jnp.ones((dim_in,), jnp.float32), 'norm2_b': jnp.zeros((dim_in,), jnp.float32),
        'ldw_dw_w': u(ks[16], (3, 3, dim_in), 9),     'ldw_dw_b': u(ks[17], (dim_in,), 9),
        'ldw_pw_w': u(ks[18], (dim_in, dim_out), dim_in),
        'ldw_pw_b': u(ks[19], (dim_out,), dim_in),
    }


# ---------------------------------------------------------------------------
# wrapper: NCHW in, NCHW out
# ---------------------------------------------------------------------------
def ghpa_pallas(x_nchw, p):
    B, Cin, H, W = x_nchw.shape
    assert Cin % 4 == 0
    C = Cin // 4
    L = H * W            # best lane density when L is a multiple of 128 (16*16=256 here)
    Cout = p['ldw_pw_w'].shape[1]

    # free reinterpretation of contiguous NCHW memory -> lane-dense (B, Cin, L)
    x = x_nchw.astype(jnp.float32).reshape(B, Cin, L)

    # data-independent attention maps, expanded to (3C, L) so the in-kernel
    # Hadamard step is a single lane-dense multiply
    attn_xy, attn_zx, attn_zy = compute_attn_maps(p, H, W)
    attn_all = jnp.concatenate([
        attn_xy.reshape(C, L),
        jnp.repeat(attn_zx, W, axis=1),    # value at (c, h*W+w) = attn_zx[c, h]
        jnp.tile(attn_zy, (1, H)),         # value at (c, h*W+w) = attn_zy[c, w]
    ], axis=0).astype(jnp.float32)

    # per-tap validity masks for the zero-padded depthwise 3x3 convs
    pos = jnp.arange(L, dtype=jnp.int32)
    hh, ww = pos // W, pos % W
    mask9 = jnp.stack(
        [((hh + dh >= 0) & (hh + dh < H) & (ww + dw >= 0) & (ww + dw < W))
         for dh in (-1, 0, 1) for dw in (-1, 0, 1)],
        axis=0).astype(jnp.float32)        # (9, L)

    col = lambda v: v.reshape(-1, 1)                                  # per-channel -> (n,1)
    taps = lambda w: jnp.transpose(w, (2, 0, 1)).reshape(w.shape[2], 9)   # (3,3,C) -> (C,9)

    def full(shape):
        return pl.BlockSpec(shape, lambda b, _n=len(shape): (0,) * _n)

    # TODO(synk): for very large H*W, tile the grid over rows (with a 1-row halo
    # for the 3x3 convs) to respect v7x's 64 MiB VMEM; unnecessary at these sizes.
    out = pl.pallas_call(
        partial(ghpa_kernel, C=C, H=H, W=W),
        out_shape=jax.ShapeDtypeStruct((B, Cout, L), jnp.float32),
        grid=(B,),
        in_specs=[
            pl.BlockSpec((1, Cin, L), lambda b: (b, 0, 0)),   # x
            full((3 * C, L)),                                  # attn maps
            full((9, L)),                                      # dw-conv masks
            full((Cin, 1)), full((Cin, 1)),                    # norm1 w, b
            full((Cin, 1)), full((Cin, 1)),                    # norm2 w, b
            full((C, C)), full((C, 1)),                        # dw 1x1 w (out,in), b
            full((C, 9)), full((C, 1)),                        # dw depthwise taps, b
            full((Cin, 9)), full((Cin, 1)),                    # ldw depthwise taps, b
            full((Cout, Cin)), full((Cout, 1)),                # ldw 1x1 w (out,in), b
        ],
        out_specs=pl.BlockSpec((1, Cout, L), lambda b: (b, 0, 0)),
        compiler_params=pltpu.CompilerParams(dimension_semantics=("parallel",)),
    )(
        x, attn_all, mask9,
        col(p['norm1_w']), col(p['norm1_b']), col(p['norm2_w']), col(p['norm2_b']),
        p['dw_pw_w'].T, col(p['dw_pw_b']), taps(p['dw_dw_w']), col(p['dw_dw_b']),
        taps(p['ldw_dw_w']), col(p['ldw_dw_b']), p['ldw_pw_w'].T, col(p['ldw_pw_b']),
    )
    return out.reshape(B, Cout, H, W)                                  # NCHW


# ---------------------------------------------------------------------------
# pure-JAX reference (same math, NCHW, no Pallas) for a correctness check
# ---------------------------------------------------------------------------
def ghpa_reference(x, p):
    B, Cin, H, W = x.shape
    C = Cin // 4
    x = x.astype(jnp.float32)
    attn_xy, attn_zx, attn_zy = compute_attn_maps(p, H, W)

    def ln_cf(v, w, b):
        u = jnp.mean(v, axis=1, keepdims=True)
        s = jnp.mean((v - u) ** 2, axis=1, keepdims=True)
        return (v - u) / jnp.sqrt(s + EPS) * w[None, :, None, None] + b[None, :, None, None]

    def dw3x3_nchw(v, w, b):
        Hh, Ww = v.shape[2], v.shape[3]
        vp = jnp.pad(v, ((0, 0), (0, 0), (1, 1), (1, 1)))
        acc = jnp.zeros_like(v)
        for kh in range(3):
            for kw in range(3):
                acc = acc + vp[:, :, kh:kh + Hh, kw:kw + Ww] * w[kh, kw, :][None, :, None, None]
        return acc + b[None, :, None, None]

    xn = ln_cf(x, p['norm1_w'], p['norm1_b'])
    x1 = xn[:, 0 * C:1 * C] * attn_xy[None]
    x2 = xn[:, 1 * C:2 * C] * attn_zx[None, :, :, None]
    x3 = xn[:, 2 * C:3 * C] * attn_zy[None, :, None, :]
    x4 = xn[:, 3 * C:4 * C]
    y = _gelu_exact(jnp.einsum('bihw,io->bohw', x4, p['dw_pw_w'])
                    + p['dw_pw_b'][None, :, None, None])
    x4 = dw3x3_nchw(y, p['dw_dw_w'], p['dw_dw_b'])
    xc = ln_cf(jnp.concatenate([x1, x2, x3, x4], axis=1), p['norm2_w'], p['norm2_b'])
    z = _gelu_exact(dw3x3_nchw(xc, p['ldw_dw_w'], p['ldw_dw_b']))
    z = jnp.einsum('bihw,io->bohw', z, p['ldw_pw_w']) + p['ldw_pw_b'][None, :, None, None]
    return z


if __name__ == "__main__":
    key = jax.random.PRNGKey(0)
    kx, kp = jax.random.split(key)

    B, dim_in, dim_out, H, W = 2, 32, 24, 16, 16
    x = jax.random.normal(kx, (B, dim_in, H, W), jnp.float32)
    params = init_params(kp, dim_in, dim_out)

    out = jax.block_until_ready(ghpa_pallas(x, params))
    assert out.shape == (B, dim_out, H, W)

    ref = jax.block_until_ready(ghpa_reference(x, params))
    max_err = float(jnp.max(jnp.abs(out - ref)))
    assert max_err < 5e-3, f"mismatch vs reference: {max_err}"

    print("KERNEL_OK")
</pallas_src>

<mosaic_0001>
module attributes {stable_mosaic.version = 11 : i64} {
  func.func @ghpa_kernel(%arg0: i32, %arg1: memref<1x32x256xf32, #tpu.memory_space<vmem>>, %arg2: memref<24x256xf32, #tpu.memory_space<vmem>>, %arg3: memref<9x256xf32, #tpu.memory_space<vmem>>, %arg4: memref<32x1xf32, #tpu.memory_space<vmem>>, %arg5: memref<32x1xf32, #tpu.memory_space<vmem>>, %arg6: memref<32x1xf32, #tpu.memory_space<vmem>>, %arg7: memref<32x1xf32, #tpu.memory_space<vmem>>, %arg8: memref<8x8xf32, #tpu.memory_space<vmem>>, %arg9: memref<8x1xf32, #tpu.memory_space<vmem>>, %arg10: memref<8x9xf32, #tpu.memory_space<vmem>>, %arg11: memref<8x1xf32, #tpu.memory_space<vmem>>, %arg12: memref<32x9xf32, #tpu.memory_space<vmem>>, %arg13: memref<32x1xf32, #tpu.memory_space<vmem>>, %arg14: memref<24x32xf32, #tpu.memory_space<vmem>>, %arg15: memref<24x1xf32, #tpu.memory_space<vmem>>, %arg16: memref<1x24x256xf32, #tpu.memory_space<vmem>>) attributes {dimension_semantics = [#tpu.dimension_semantics<parallel>], iteration_bounds = array<i64: 2>, scalar_prefetch = 0 : i64, scratch_operands = 0 : i64, tpu.core_type = #tpu.core_type<tc>, window_params = [{transform_indices = @transform_0, window_bounds = array<i64: 1, 32, 256>}, {pipeline_mode = #tpu.pipeline_mode<synchronous>, transform_indices = @transform_1, window_bounds = array<i64: 24, 256>}, {pipeline_mode = #tpu.pipeline_mode<synchronous>, transform_indices = @transform_2, window_bounds = array<i64: 9, 256>}, {pipeline_mode = #tpu.pipeline_mode<synchronous>, transform_indices = @transform_3, window_bounds = array<i64: 32, 1>}, {pipeline_mode = #tpu.pipeline_mode<synchronous>, transform_indices = @transform_4, window_bounds = array<i64: 32, 1>}, {pipeline_mode = #tpu.pipeline_mode<synchronous>, transform_indices = @transform_5, window_bounds = array<i64: 32, 1>}, {pipeline_mode = #tpu.pipeline_mode<synchronous>, transform_indices = @transform_6, window_bounds = array<i64: 32, 1>}, {pipeline_mode = #tpu.pipeline_mode<synchronous>, transform_indices = @transform_7, window_bounds = array<i64: 8, 8>}, {pipeline_mode = #tpu.pipeline_mode<synchronous>, transform_indices = @transform_8, window_bounds = array<i64: 8, 1>}, {pipeline_mode = #tpu.pipeline_mode<synchronous>, transform_indices = @transform_9, window_bounds = array<i64: 8, 9>}, {pipeline_mode = #tpu.pipeline_mode<synchronous>, transform_indices = @transform_10, window_bounds = array<i64: 8, 1>}, {pipeline_mode = #tpu.pipeline_mode<synchronous>, transform_indices = @transform_11, window_bounds = array<i64: 32, 9>}, {pipeline_mode = #tpu.pipeline_mode<synchronous>, transform_indices = @transform_12, window_bounds = array<i64: 32, 1>}, {pipeline_mode = #tpu.pipeline_mode<synchronous>, transform_indices = @transform_13, window_bounds = array<i64: 24, 32>}, {pipeline_mode = #tpu.pipeline_mode<synchronous>, transform_indices = @transform_14, window_bounds = array<i64: 24, 1>}, {transform_indices = @transform_15, window_bounds = array<i64: 1, 24, 256>}]} {
    %c0 = arith.constant 0 : index
    %c0_0 = arith.constant 0 : index
    %c0_1 = arith.constant 0 : index
    %0 = vector.load %arg1[%c0, %c0_0, %c0_1] : memref<1x32x256xf32, #tpu.memory_space<vmem>>, vector<1x32x256xf32>
    %1 = vector.shape_cast %0 : vector<1x32x256xf32> to vector<32x256xf32>
    %c0_2 = arith.constant 0 : index
    %c0_3 = arith.constant 0 : index
    %2 = vector.load %arg3[%c0_2, %c0_3] : memref<9x256xf32, #tpu.memory_space<vmem>>, vector<9x256xf32>
    %c0_4 = arith.constant 0 : index
    %c0_5 = arith.constant 0 : index
    %3 = vector.load %arg4[%c0_4, %c0_5] : memref<32x1xf32, #tpu.memory_space<vmem>>, vector<32x1xf32>
    %c0_6 = arith.constant 0 : index
    %c0_7 = arith.constant 0 : index
    %4 = vector.load %arg5[%c0_6, %c0_7] : memref<32x1xf32, #tpu.memory_space<vmem>>, vector<32x1xf32>
    %cst = arith.constant dense<0.000000e+00> : vector<256xf32>
    %5 = vector.multi_reduction <add>, %1, %cst [0] : vector<32x256xf32> to vector<256xf32>
    %6 = vector.shape_cast %5 : vector<256xf32> to vector<1x256xf32>
    %cst_8 = arith.constant 3.200000e+01 : f32
    %7 = vector.broadcast %cst_8 : f32 to vector<1x256xf32>
    %8 = arith.divf %6, %7 : vector<1x256xf32>
    %9 = vector.broadcast %8 : vector<1x256xf32> to vector<32x256xf32>
    %10 = arith.subf %1, %9 : vector<32x256xf32>
    %11 = arith.mulf %10, %10 : vector<32x256xf32>
    %cst_9 = arith.constant dense<0.000000e+00> : vector<256xf32>
    %12 = vector.multi_reduction <add>, %11, %cst_9 [0] : vector<32x256xf32> to vector<256xf32>
    %13 = vector.shape_cast %12 : vector<256xf32> to vector<1x256xf32>
    %cst_10 = arith.constant 3.200000e+01 : f32
    %14 = vector.broadcast %cst_10 : f32 to vector<1x256xf32>
    %15 = arith.divf %13, %14 : vector<1x256xf32>
    %cst_11 = arith.constant 9.99999997E-7 : f32
    %16 = vector.broadcast %cst_11 : f32 to vector<1x256xf32>
    %17 = arith.addf %15, %16 : vector<1x256xf32>
    %18 = math.rsqrt %17 : vector<1x256xf32>
    %19 = vector.broadcast %18 : vector<1x256xf32> to vector<32x256xf32>
    %20 = arith.mulf %10, %19 : vector<32x256xf32>
    %21 = vector.broadcast %3 : vector<32x1xf32> to vector<32x256xf32>
    %22 = arith.mulf %20, %21 : vector<32x256xf32>
    %23 = vector.broadcast %4 : vector<32x1xf32> to vector<32x256xf32>
    %24 = arith.addf %22, %23 : vector<32x256xf32>
    %25 = vector.extract_strided_slice %24 {offsets = [0, 0], sizes = [24, 256], strides = [1, 1]} : vector<32x256xf32> to vector<24x256xf32>
    %c0_12 = arith.constant 0 : index
    %c0_13 = arith.constant 0 : index
    %26 = vector.load %arg2[%c0_12, %c0_13] : memref<24x256xf32, #tpu.memory_space<vmem>>, vector<24x256xf32>
    %27 = arith.mulf %25, %26 : vector<24x256xf32>
    %28 = vector.extract_strided_slice %24 {offsets = [24, 0], sizes = [8, 256], strides = [1, 1]} : vector<32x256xf32> to vector<8x256xf32>
    %c0_14 = arith.constant 0 : index
    %c0_15 = arith.constant 0 : index
    %29 = vector.load %arg8[%c0_14, %c0_15] : memref<8x8xf32, #tpu.memory_space<vmem>>, vector<8x8xf32>
    %cst_16 = arith.constant dense<0.000000e+00> : vector<8x256xf32>
    %30 = tpu.matmul %29, %28, %cst_16 {dimension_numbers = #tpu.dot_dimension_numbers<[1], [0], [0], [1], [0, 0, 1, 1], [], []>} : vector<8x8xf32>, vector<8x256xf32>, vector<8x256xf32> -> vector<8x256xf32>
    %c0_17 = arith.constant 0 : index
    %c0_18 = arith.constant 0 : index
    %31 = vector.load %arg9[%c0_17, %c0_18] : memref<8x1xf32, #tpu.memory_space<vmem>>, vector<8x1xf32>
    %32 = vector.broadcast %31 : vector<8x1xf32> to vector<8x256xf32>
    %33 = arith.addf %30, %32 : vector<8x256xf32>
    %cst_19 = arith.constant 5.000000e-01 : f32
    %34 = vector.broadcast %cst_19 : f32 to vector<8x256xf32>
    %35 = arith.mulf %34, %33 : vector<8x256xf32>
    %cst_20 = arith.constant 0.707106769 : f32
    %36 = vector.broadcast %cst_20 : f32 to vector<8x256xf32>
    %37 = arith.mulf %33, %36 : vector<8x256xf32>
    %38 = math.erf %37 : vector<8x256xf32>
    %cst_21 = arith.constant 1.000000e+00 : f32
    %39 = vector.broadcast %cst_21 : f32 to vector<8x256xf32>
    %40 = arith.addf %39, %38 : vector<8x256xf32>
    %41 = arith.mulf %35, %40 : vector<8x256xf32>
    %c0_22 = arith.constant 0 : index
    %c0_23 = arith.constant 0 : index
    %42 = vector.load %arg10[%c0_22, %c0_23] : memref<8x9xf32, #tpu.memory_space<vmem>>, vector<8x9xf32>
    %c0_24 = arith.constant 0 : index
    %c0_25 = arith.constant 0 : index
    %43 = vector.load %arg11[%c0_24, %c0_25] : memref<8x1xf32, #tpu.memory_space<vmem>>, vector<8x1xf32>
    %44 = vector.extract_strided_slice %42 {offsets = [0, 4], sizes = [8, 1], strides = [1, 1]} : vector<8x9xf32> to vector<8x1xf32>
    %45 = vector.broadcast %44 : vector<8x1xf32> to vector<8x256xf32>
    %46 = arith.mulf %41, %45 : vector<8x256xf32>
    %c17_i32 = arith.constant 17 : i32
    %47 = tpu.dynamic_rotate %41 by %c17_i32 dim 1 : vector<8x256xf32>, i32 -> vector<8x256xf32>
    %48 = vector.extract_strided_slice %2 {offsets = [0, 0], sizes = [1, 256], strides = [1, 1]} : vector<9x256xf32> to vector<1x256xf32>
    %49 = vector.broadcast %48 : vector<1x256xf32> to vector<8x256xf32>
    %50 = arith.mulf %47, %49 : vector<8x256xf32>
    %51 = vector.extract_strided_slice %42 {offsets = [0, 0], sizes = [8, 1], strides = [1, 1]} : vector<8x9xf32> to vector<8x1xf32>
    %52 = vector.broadcast %51 : vector<8x1xf32> to vector<8x256xf32>
    %53 = arith.mulf %50, %52 : vector<8x256xf32>
    %54 = arith.addf %46, %53 : vector<8x256xf32>
    %c16_i32 = arith.constant 16 : i32
    %55 = tpu.dynamic_rotate %41 by %c16_i32 dim 1 : vector<8x256xf32>, i32 -> vector<8x256xf32>
    %56 = vector.extract_strided_slice %2 {offsets = [1, 0], sizes = [1, 256], strides = [1, 1]} : vector<9x256xf32> to vector<1x256xf32>
    %57 = vector.broadcast %56 : vector<1x256xf32> to vector<8x256xf32>
    %58 = arith.mulf %55, %57 : vector<8x256xf32>
    %59 = vector.extract_strided_slice %42 {offsets = [0, 1], sizes = [8, 1], strides = [1, 1]} : vector<8x9xf32> to vector<8x1xf32>
    %60 = vector.broadcast %59 : vector<8x1xf32> to vector<8x256xf32>
    %61 = arith.mulf %58, %60 : vector<8x256xf32>
    %62 = arith.addf %54, %61 : vector<8x256xf32>
    %c15_i32 = arith.constant 15 : i32
    %63 = tpu.dynamic_rotate %41 by %c15_i32 dim 1 : vector<8x256xf32>, i32 -> vector<8x256xf32>
    %64 = vector.extract_strided_slice %2 {offsets = [2, 0], sizes = [1, 256], strides = [1, 1]} : vector<9x256xf32> to vector<1x256xf32>
    %65 = vector.broadcast %64 : vector<1x256xf32> to vector<8x256xf32>
    %66 = arith.mulf %63, %65 : vector<8x256xf32>
    %67 = vector.extract_strided_slice %42 {offsets = [0, 2], sizes = [8, 1], strides = [1, 1]} : vector<8x9xf32> to vector<8x1xf32>
    %68 = vector.broadcast %67 : vector<8x1xf32> to vector<8x256xf32>
    %69 = arith.mulf %66, %68 : vector<8x256xf32>
    %70 = arith.addf %62, %69 : vector<8x256xf32>
    %c1_i32 = arith.constant 1 : i32
    %71 = tpu.dynamic_rotate %41 by %c1_i32 dim 1 : vector<8x256xf32>, i32 -> vector<8x256xf32>
    %72 = vector.extract_strided_slice %2 {offsets = [3, 0], sizes = [1, 256], strides = [1, 1]} : vector<9x256xf32> to vector<1x256xf32>
    %73 = vector.broadcast %72 : vector<1x256xf32> to vector<8x256xf32>
    %74 = arith.mulf %71, %73 : vector<8x256xf32>
    %75 = vector.extract_strided_slice %42 {offsets = [0, 3], sizes = [8, 1], strides = [1, 1]} : vector<8x9xf32> to vector<8x1xf32>
    %76 = vector.broadcast %75 : vector<8x1xf32> to vector<8x256xf32>
    %77 = arith.mulf %74, %76 : vector<8x256xf32>
    %78 = arith.addf %70, %77 : vector<8x256xf32>
    %c255_i32 = arith.constant 255 : i32
    %79 = tpu.dynamic_rotate %41 by %c255_i32 dim 1 : vector<8x256xf32>, i32 -> vector<8x256xf32>
    %80 = vector.extract_strided_slice %2 {offsets = [5, 0], sizes = [1, 256], strides = [1, 1]} : vector<9x256xf32> to vector<1x256xf32>
    %81 = vector.broadcast %80 : vector<1x256xf32> to vector<8x256xf32>
    %82 = arith.mulf %79, %81 : vector<8x256xf32>
    %83 = vector.extract_strided_slice %42 {offsets = [0, 5], sizes = [8, 1], strides = [1, 1]} : vector<8x9xf32> to vector<8x1xf32>
    %84 = vector.broadcast %83 : vector<8x1xf32> to vector<8x256xf32>
    %85 = arith.mulf %82, %84 : vector<8x256xf32>
    %86 = arith.addf %78, %85 : vector<8x256xf32>
    %c241_i32 = arith.constant 241 : i32
    %87 = tpu.dynamic_rotate %41 by %c241_i32 dim 1 : vector<8x256xf32>, i32 -> vector<8x256xf32>
    %88 = vector.extract_strided_slice %2 {offsets = [6, 0], sizes = [1, 256], strides = [1, 1]} : vector<9x256xf32> to vector<1x256xf32>
    %89 = vector.broadcast %88 : vector<1x256xf32> to vector<8x256xf32>
    %90 = arith.mulf %87, %89 : vector<8x256xf32>
    %91 = vector.extract_strided_slice %42 {offsets = [0, 6], sizes = [8, 1], strides = [1, 1]} : vector<8x9xf32> to vector<8x1xf32>
    %92 = vector.broadcast %91 : vector<8x1xf32> to vector<8x256xf32>
    %93 = arith.mulf %90, %92 : vector<8x256xf32>
    %94 = arith.addf %86, %93 : vector<8x256xf32>
    %c240_i32 = arith.constant 240 : i32
    %95 = tpu.dynamic_rotate %41 by %c240_i32 dim 1 : vector<8x256xf32>, i32 -> vector<8x256xf32>
    %96 = vector.extract_strided_slice %2 {offsets = [7, 0], sizes = [1, 256], strides = [1, 1]} : vector<9x256xf32> to vector<1x256xf32>
    %97 = vector.broadcast %96 : vector<1x256xf32> to vector<8x256xf32>
    %98 = arith.mulf %95, %97 : vector<8x256xf32>
    %99 = vector.extract_strided_slice %42 {offsets = [0, 7], sizes = [8, 1], strides = [1, 1]} : vector<8x9xf32> to vector<8x1xf32>
    %100 = vector.broadcast %99 : vector<8x1xf32> to vector<8x256xf32>
    %101 = arith.mulf %98, %100 : vector<8x256xf32>
    %102 = arith.addf %94, %101 : vector<8x256xf32>
    %c239_i32 = arith.constant 239 : i32
    %103 = tpu.dynamic_rotate %41 by %c239_i32 dim 1 : vector<8x256xf32>, i32 -> vector<8x256xf32>
    %104 = vector.extract_strided_slice %2 {offsets = [8, 0], sizes = [1, 256], strides = [1, 1]} : vector<9x256xf32> to vector<1x256xf32>
    %105 = vector.broadcast %104 : vector<1x256xf32> to vector<8x256xf32>
    %106 = arith.mulf %103, %105 : vector<8x256xf32>
    %107 = vector.extract_strided_slice %42 {offsets = [0, 8], sizes = [8, 1], strides = [1, 1]} : vector<8x9xf32> to vector<8x1xf32>
    %108 = vector.broadcast %107 : vector<8x1xf32> to vector<8x256xf32>
    %109 = arith.mulf %106, %108 : vector<8x256xf32>
    %110 = arith.addf %102, %109 : vector<8x256xf32>
    %111 = vector.broadcast %43 : vector<8x1xf32> to vector<8x256xf32>
    %112 = arith.addf %110, %111 : vector<8x256xf32>
    %113 = tpu.concatenate %27, %112 in 0 : vector<24x256xf32>, vector<8x256xf32> -> vector<32x256xf32>
    %c0_26 = arith.constant 0 : index
    %c0_27 = arith.constant 0 : index
    %114 = vector.load %arg6[%c0_26, %c0_27] : memref<32x1xf32, #tpu.memory_space<vmem>>, vector<32x1xf32>
    %c0_28 = arith.constant 0 : index
    %c0_29 = arith.constant 0 : index
    %115 = vector.load %arg7[%c0_28, %c0_29] : memref<32x1xf32, #tpu.memory_space<vmem>>, vector<32x1xf32>
    %cst_30 = arith.constant dense<0.000000e+00> : vector<256xf32>
    %116 = vector.multi_reduction <add>, %113, %cst_30 [0] : vector<32x256xf32> to vector<256xf32>
    %117 = vector.shape_cast %116 : vector<256xf32> to vector<1x256xf32>
    %cst_31 = arith.constant 3.200000e+01 : f32
    %118 = vector.broadcast %cst_31 : f32 to vector<1x256xf32>
    %119 = arith.divf %117, %118 : vector<1x256xf32>
    %120 = vector.broadcast %119 : vector<1x256xf32> to vector<32x256xf32>
    %121 = arith.subf %113, %120 : vector<32x256xf32>
    %122 = arith.mulf %121, %121 : vector<32x256xf32>
    %cst_32 = arith.constant dense<0.000000e+00> : vector<256xf32>
    %123 = vector.multi_reduction <add>, %122, %cst_32 [0] : vector<32x256xf32> to vector<256xf32>
    %124 = vector.shape_cast %123 : vector<256xf32> to vector<1x256xf32>
    %cst_33 = arith.constant 3.200000e+01 : f32
    %125 = vector.broadcast %cst_33 : f32 to vector<1x256xf32>
    %126 = arith.divf %124, %125 : vector<1x256xf32>
    %cst_34 = arith.constant 9.99999997E-7 : f32
    %127 = vector.broadcast %cst_34 : f32 to vector<1x256xf32>
    %128 = arith.addf %126, %127 : vector<1x256xf32>
    %129 = math.rsqrt %128 : vector<1x256xf32>
    %130 = vector.broadcast %129 : vector<1x256xf32> to vector<32x256xf32>
    %131 = arith.mulf %121, %130 : vector<32x256xf32>
    %132 = vector.broadcast %114 : vector<32x1xf32> to vector<32x256xf32>
    %133 = arith.mulf %131, %132 : vector<32x256xf32>
    %134 = vector.broadcast %115 : vector<32x1xf32> to vector<32x256xf32>
    %135 = arith.addf %133, %134 : vector<32x256xf32>
    %c0_35 = arith.constant 0 : index
    %c0_36 = arith.constant 0 : index
    %136 = vector.load %arg12[%c0_35, %c0_36] : memref<32x9xf32, #tpu.memory_space<vmem>>, vector<32x9xf32>
    %c0_37 = arith.constant 0 : index
    %c0_38 = arith.constant 0 : index
    %137 = vector.load %arg13[%c0_37, %c0_38] : memref<32x1xf32, #tpu.memory_space<vmem>>, vector<32x1xf32>
    %138 = vector.extract_strided_slice %136 {offsets = [0, 4], sizes = [32, 1], strides = [1, 1]} : vector<32x9xf32> to vector<32x1xf32>
    %139 = vector.broadcast %138 : vector<32x1xf32> to vector<32x256xf32>
    %140 = arith.mulf %135, %139 : vector<32x256xf32>
    %c17_i32_39 = arith.constant 17 : i32
    %141 = tpu.dynamic_rotate %135 by %c17_i32_39 dim 1 : vector<32x256xf32>, i32 -> vector<32x256xf32>
    %142 = vector.extract_strided_slice %2 {offsets = [0, 0], sizes = [1, 256], strides = [1, 1]} : vector<9x256xf32> to vector<1x256xf32>
    %143 = vector.broadcast %142 : vector<1x256xf32> to vector<32x256xf32>
    %144 = arith.mulf %141, %143 : vector<32x256xf32>
    %145 = vector.extract_strided_slice %136 {offsets = [0, 0], sizes = [32, 1], strides = [1, 1]} : vector<32x9xf32> to vector<32x1xf32>
    %146 = vector.broadcast %145 : vector<32x1xf32> to vector<32x256xf32>
    %147 = arith.mulf %144, %146 : vector<32x256xf32>
    %148 = arith.addf %140, %147 : vector<32x256xf32>
    %c16_i32_40 = arith.constant 16 : i32
    %149 = tpu.dynamic_rotate %135 by %c16_i32_40 dim 1 : vector<32x256xf32>, i32 -> vector<32x256xf32>
    %150 = vector.extract_strided_slice %2 {offsets = [1, 0], sizes = [1, 256], strides = [1, 1]} : vector<9x256xf32> to vector<1x256xf32>
    %151 = vector.broadcast %150 : vector<1x256xf32> to vector<32x256xf32>
    %152 = arith.mulf %149, %151 : vector<32x256xf32>
    %153 = vector.extract_strided_slice %136 {offsets = [0, 1], sizes = [32, 1], strides = [1, 1]} : vector<32x9xf32> to vector<32x1xf32>
    %154 = vector.broadcast %153 : vector<32x1xf32> to vector<32x256xf32>
    %155 = arith.mulf %152, %154 : vector<32x256xf32>
    %156 = arith.addf %148, %155 : vector<32x256xf32>
    %c15_i32_41 = arith.constant 15 : i32
    %157 = tpu.dynamic_rotate %135 by %c15_i32_41 dim 1 : vector<32x256xf32>, i32 -> vector<32x256xf32>
    %158 = vector.extract_strided_slice %2 {offsets = [2, 0], sizes = [1, 256], strides = [1, 1]} : vector<9x256xf32> to vector<1x256xf32>
    %159 = vector.broadcast %158 : vector<1x256xf32> to vector<32x256xf32>
    %160 = arith.mulf %157, %159 : vector<32x256xf32>
    %161 = vector.extract_strided_slice %136 {offsets = [0, 2], sizes = [32, 1], strides = [1, 1]} : vector<32x9xf32> to vector<32x1xf32>
    %162 = vector.broadcast %161 : vector<32x1xf32> to vector<32x256xf32>
    %163 = arith.mulf %160, %162 : vector<32x256xf32>
    %164 = arith.addf %156, %163 : vector<32x256xf32>
    %c1_i32_42 = arith.constant 1 : i32
    %165 = tpu.dynamic_rotate %135 by %c1_i32_42 dim 1 : vector<32x256xf32>, i32 -> vector<32x256xf32>
    %166 = vector.extract_strided_slice %2 {offsets = [3, 0], sizes = [1, 256], strides = [1, 1]} : vector<9x256xf32> to vector<1x256xf32>
    %167 = vector.broadcast %166 : vector<1x256xf32> to vector<32x256xf32>
    %168 = arith.mulf %165, %167 : vector<32x256xf32>
    %169 = vector.extract_strided_slice %136 {offsets = [0, 3], sizes = [32, 1], strides = [1, 1]} : vector<32x9xf32> to vector<32x1xf32>
    %170 = vector.broadcast %169 : vector<32x1xf32> to vector<32x256xf32>
    %171 = arith.mulf %168, %170 : vector<32x256xf32>
    %172 = arith.addf %164, %171 : vector<32x256xf32>
    %c255_i32_43 = arith.constant 255 : i32
    %173 = tpu.dynamic_rotate %135 by %c255_i32_43 dim 1 : vector<32x256xf32>, i32 -> vector<32x256xf32>
    %174 = vector.extract_strided_slice %2 {offsets = [5, 0], sizes = [1, 256], strides = [1, 1]} : vector<9x256xf32> to vector<1x256xf32>
    %175 = vector.broadcast %174 : vector<1x256xf32> to vector<32x256xf32>
    %176 = arith.mulf %173, %175 : vector<32x256xf32>
    %177 = vector.extract_strided_slice %136 {offsets = [0, 5], sizes = [32, 1], strides = [1, 1]} : vector<32x9xf32> to vector<32x1xf32>
    %178 = vector.broadcast %177 : vector<32x1xf32> to vector<32x256xf32>
    %179 = arith.mulf %176, %178 : vector<32x256xf32>
    %180 = arith.addf %172, %179 : vector<32x256xf32>
    %c241_i32_44 = arith.constant 241 : i32
    %181 = tpu.dynamic_rotate %135 by %c241_i32_44 dim 1 : vector<32x256xf32>, i32 -> vector<32x256xf32>
    %182 = vector.extract_strided_slice %2 {offsets = [6, 0], sizes = [1, 256], strides = [1, 1]} : vector<9x256xf32> to vector<1x256xf32>
    %183 = vector.broadcast %182 : vector<1x256xf32> to vector<32x256xf32>
    %184 = arith.mulf %181, %183 : vector<32x256xf32>
    %185 = vector.extract_strided_slice %136 {offsets = [0, 6], sizes = [32, 1], strides = [1, 1]} : vector<32x9xf32> to vector<32x1xf32>
    %186 = vector.broadcast %185 : vector<32x1xf32> to vector<32x256xf32>
    %187 = arith.mulf %184, %186 : vector<32x256xf32>
    %188 = arith.addf %180, %187 : vector<32x256xf32>
    %c240_i32_45 = arith.constant 240 : i32
    %189 = tpu.dynamic_rotate %135 by %c240_i32_45 dim 1 : vector<32x256xf32>, i32 -> vector<32x256xf32>
    %190 = vector.extract_strided_slice %2 {offsets = [7, 0], sizes = [1, 256], strides = [1, 1]} : vector<9x256xf32> to vector<1x256xf32>
    %191 = vector.broadcast %190 : vector<1x256xf32> to vector<32x256xf32>
    %192 = arith.mulf %189, %191 : vector<32x256xf32>
    %193 = vector.extract_strided_slice %136 {offsets = [0, 7], sizes = [32, 1], strides = [1, 1]} : vector<32x9xf32> to vector<32x1xf32>
    %194 = vector.broadcast %193 : vector<32x1xf32> to vector<32x256xf32>
    %195 = arith.mulf %192, %194 : vector<32x256xf32>
    %196 = arith.addf %188, %195 : vector<32x256xf32>
    %c239_i32_46 = arith.constant 239 : i32
    %197 = tpu.dynamic_rotate %135 by %c239_i32_46 dim 1 : vector<32x256xf32>, i32 -> vector<32x256xf32>
    %198 = vector.extract_strided_slice %2 {offsets = [8, 0], sizes = [1, 256], strides = [1, 1]} : vector<9x256xf32> to vector<1x256xf32>
    %199 = vector.broadcast %198 : vector<1x256xf32> to vector<32x256xf32>
    %200 = arith.mulf %197, %199 : vector<32x256xf32>
    %201 = vector.extract_strided_slice %136 {offsets = [0, 8], sizes = [32, 1], strides = [1, 1]} : vector<32x9xf32> to vector<32x1xf32>
    %202 = vector.broadcast %201 : vector<32x1xf32> to vector<32x256xf32>
    %203 = arith.mulf %200, %202 : vector<32x256xf32>
    %204 = arith.addf %196, %203 : vector<32x256xf32>
    %205 = vector.broadcast %137 : vector<32x1xf32> to vector<32x256xf32>
    %206 = arith.addf %204, %205 : vector<32x256xf32>
    %cst_47 = arith.constant 5.000000e-01 : f32
    %207 = vector.broadcast %cst_47 : f32 to vector<32x256xf32>
    %208 = arith.mulf %207, %206 : vector<32x256xf32>
    %cst_48 = arith.constant 0.707106769 : f32
    %209 = vector.broadcast %cst_48 : f32 to vector<32x256xf32>
    %210 = arith.mulf %206, %209 : vector<32x256xf32>
    %211 = math.erf %210 : vector<32x256xf32>
    %cst_49 = arith.constant 1.000000e+00 : f32
    %212 = vector.broadcast %cst_49 : f32 to vector<32x256xf32>
    %213 = arith.addf %212, %211 : vector<32x256xf32>
    %214 = arith.mulf %208, %213 : vector<32x256xf32>
    %c0_50 = arith.constant 0 : index
    %c0_51 = arith.constant 0 : index
    %215 = vector.load %arg14[%c0_50, %c0_51] : memref<24x32xf32, #tpu.memory_space<vmem>>, vector<24x32xf32>
    %cst_52 = arith.constant dense<0.000000e+00> : vector<24x256xf32>
    %216 = tpu.matmul %215, %214, %cst_52 {dimension_numbers = #tpu.dot_dimension_numbers<[1], [0], [0], [1], [0, 0, 1, 1], [], []>} : vector<24x32xf32>, vector<32x256xf32>, vector<24x256xf32> -> vector<24x256xf32>
    %c0_53 = arith.constant 0 : index
    %c0_54 = arith.constant 0 : index
    %217 = vector.load %arg15[%c0_53, %c0_54] : memref<24x1xf32, #tpu.memory_space<vmem>>, vector<24x1xf32>
    %218 = vector.broadcast %217 : vector<24x1xf32> to vector<24x256xf32>
    %219 = arith.addf %216, %218 : vector<24x256xf32>
    %c0_55 = arith.constant 0 : index
    %c0_56 = arith.constant 0 : index
    %c0_57 = arith.constant 0 : index
    %220 = vector.load %arg16[%c0_55, %c0_56, %c0_57] : memref<1x24x256xf32, #tpu.memory_space<vmem>>, vector<1x24x256xf32>
    %221 = vector.shape_cast %220 : vector<1x24x256xf32> to vector<24x256xf32>
    %222 = vector.shape_cast %219 : vector<24x256xf32> to vector<1x24x256xf32>
    tpu.vector_store %arg16[%c0_55, %c0_56, %c0_57], %222 {strides = array<i32>} : memref<1x24x256xf32, #tpu.memory_space<vmem>>, vector<1x24x256xf32>,
    return
  }
  func.func @transform_0(%arg0: i32) -> (i32, i32, i32) {
    %c0_i32 = arith.constant 0 : i32
    %c0_i32_0 = arith.constant 0 : i32
    %c0_i32_1 = arith.constant 0 : i32
    return %arg0, %c0_i32, %c0_i32_0 : i32, i32, i32
  }
  func.func @transform_1(%arg0: i32) -> (i32, i32) {
    %c0_i32 = arith.constant 0 : i32
    %c0_i32_0 = arith.constant 0 : i32
    %c0_i32_1 = arith.constant 0 : i32
    return %c0_i32, %c0_i32_0 : i32, i32
  }
  func.func @transform_2(%arg0: i32) -> (i32, i32) {
    %c0_i32 = arith.constant 0 : i32
    %c0_i32_0 = arith.constant 0 : i32
    %c0_i32_1 = arith.constant 0 : i32
    return %c0_i32, %c0_i32_0 : i32, i32
  }
  func.func @transform_3(%arg0: i32) -> (i32, i32) {
    %c0_i32 = arith.constant 0 : i32
    %c0_i32_0 = arith.constant 0 : i32
    %c0_i32_1 = arith.constant 0 : i32
    return %c0_i32, %c0_i32_0 : i32, i32
  }
  func.func @transform_4(%arg0: i32) -> (i32, i32) {
    %c0_i32 = arith.constant 0 : i32
    %c0_i32_0 = arith.constant 0 : i32
    %c0_i32_1 = arith.constant 0 : i32
    return %c0_i32, %c0_i32_0 : i32, i32
  }
  func.func @transform_5(%arg0: i32) -> (i32, i32) {
    %c0_i32 = arith.constant 0 : i32
    %c0_i32_0 = arith.constant 0 : i32
    %c0_i32_1 = arith.constant 0 : i32
    return %c0_i32, %c0_i32_0 : i32, i32
  }
  func.func @transform_6(%arg0: i32) -> (i32, i32) {
    %c0_i32 = arith.constant 0 : i32
    %c0_i32_0 = arith.constant 0 : i32
    %c0_i32_1 = arith.constant 0 : i32
    return %c0_i32, %c0_i32_0 : i32, i32
  }
  func.func @transform_7(%arg0: i32) -> (i32, i32) {
    %c0_i32 = arith.constant 0 : i32
    %c0_i32_0 = arith.constant 0 : i32
    %c0_i32_1 = arith.constant 0 : i32
    return %c0_i32, %c0_i32_0 : i32, i32
  }
  func.func @transform_8(%arg0: i32) -> (i32, i32) {
    %c0_i32 = arith.constant 0 : i32
    %c0_i32_0 = arith.constant 0 : i32
    %c0_i32_1 = arith.constant 0 : i32
    return %c0_i32, %c0_i32_0 : i32, i32
  }
  func.func @transform_9(%arg0: i32) -> (i32, i32) {
    %c0_i32 = arith.constant 0 : i32
    %c0_i32_0 = arith.constant 0 : i32
    %c0_i32_1 = arith.constant 0 : i32
    return %c0_i32, %c0_i32_0 : i32, i32
  }
  func.func @transform_10(%arg0: i32) -> (i32, i32) {
    %c0_i32 = arith.constant 0 : i32
    %c0_i32_0 = arith.constant 0 : i32
    %c0_i32_1 = arith.constant 0 : i32
    return %c0_i32, %c0_i32_0 : i32, i32
  }
  func.func @transform_11(%arg0: i32) -> (i32, i32) {
    %c0_i32 = arith.constant 0 : i32
    %c0_i32_0 = arith.constant 0 : i32
    %c0_i32_1 = arith.constant 0 : i32
    return %c0_i32, %c0_i32_0 : i32, i32
  }
  func.func @transform_12(%arg0: i32) -> (i32, i32) {
    %c0_i32 = arith.constant 0 : i32
    %c0_i32_0 = arith.constant 0 : i32
    %c0_i32_1 = arith.constant 0 : i32
    return %c0_i32, %c0_i32_0 : i32, i32
  }
  func.func @transform_13(%arg0: i32) -> (i32, i32) {
    %c0_i32 = arith.constant 0 : i32
    %c0_i32_0 = arith.constant 0 : i32
    %c0_i32_1 = arith.constant 0 : i32
    return %c0_i32, %c0_i32_0 : i32, i32
  }
  func.func @transform_14(%arg0: i32) -> (i32, i32) {
    %c0_i32 = arith.constant 0 : i32
    %c0_i32_0 = arith.constant 0 : i32
    %c0_i32_1 = arith.constant 0 : i32
    return %c0_i32, %c0_i32_0 : i32, i32
  }
  func.func @transform_15(%arg0: i32) -> (i32, i32, i32) {
    %c0_i32 = arith.constant 0 : i32
    %c0_i32_0 = arith.constant 0 : i32
    %c0_i32_1 = arith.constant 0 : i32
    return %arg0, %c0_i32, %c0_i32_0 : i32, i32, i32
  }
}

</mosaic_0001>

<llo_original>
// kernel: tpu_custom_call.1
$region0: #{tpu_custom_call.1}
  #allocation0 [shape = 'u32[]', space=smem, size = 0x4, offset = 0x4, fixed_abs, tag = 'smem constant byte address 0x4 - core index']
  #allocation1 [shape = 'u32[72,128]{1,0:T(1,128)}', space=vmem, size = 0x9000, scoped, tag = 'internal scratch']
  %s0 = inlined_call_operand.hbm [shape: f32[2,32,256], index: 0, kind: input, shape index: {}]
  %s1 = inlined_call_operand.vmem [shape: f32[24,256], index: 1, kind: input, shape index: {}]
  %s2 = inlined_call_operand.vmem [shape: f32[9,256], index: 2, kind: input, shape index: {}]
  %s3 = inlined_call_operand.vmem [shape: f32[32,1], index: 3, kind: input, shape index: {}]
  %s4 = inlined_call_operand.vmem [shape: f32[32,1], index: 4, kind: input, shape index: {}]
  %s5 = inlined_call_operand.vmem [shape: f32[32,1], index: 5, kind: input, shape index: {}]
  %s6 = inlined_call_operand.vmem [shape: f32[32,1], index: 6, kind: input, shape index: {}]
  %s7 = inlined_call_operand.vmem [shape: f32[8,8], index: 7, kind: input, shape index: {}]
  %s8 = inlined_call_operand.vmem [shape: f32[8,1], index: 8, kind: input, shape index: {}]
  %s9 = inlined_call_operand.vmem [shape: f32[8,9], index: 9, kind: input, shape index: {}]
  %s10 = inlined_call_operand.vmem [shape: f32[8,1], index: 10, kind: input, shape index: {}]
  %s11 = inlined_call_operand.vmem [shape: f32[32,9], index: 11, kind: input, shape index: {}]
  %s12 = inlined_call_operand.vmem [shape: f32[32,1], index: 12, kind: input, shape index: {}]
  %s13 = inlined_call_operand.vmem [shape: f32[24,32], index: 13, kind: input, shape index: {}]
  %s14 = inlined_call_operand.vmem [shape: f32[24,1], index: 14, kind: input, shape index: {}]
  %s15 = inlined_call_operand.hbm [shape: f32[2,24,256], index: 15, kind: output, shape index: {}]
  %s16 = sld [smem:[#allocation0]]
  $region97: #{tpu_custom_call.1} parent=0
    _
  %s18 = ssub.s32 1, %s16
  %s19 = scalar_select 0, %s18, %s16
  $region1: #{tpu_custom_call.1} parent=0
    #allocation2 [shape = 'u8[65536]{0}', space=vmem, size = 0x10000, scoped, tag = 'input window, operand 0']
    #allocation3 [shape = 's32[2]{0}', space=sflag, size = 0x8, scoped, tag = 'scoped memory for tpu_custom_call.1']
    #allocation4 [shape = 's32[2]{0}', space=sflag, size = 0x8, scoped, tag = 'scoped memory for tpu_custom_call.1']
    #allocation5 [shape = 'u8[49152]{0}', space=vmem, size = 0xc000, scoped, tag = 'output window, operand 0']
    %20 = vsyncpa [#allocation3], 0
    %s21 = scalar_lea.sflag [#allocation3], 1
    %22 = vsyncpa %s21, 0
    %23 = vsyncpa [#allocation4], 0
    %s24 = scalar_lea.sflag [#allocation4], 1
    %25 = vsyncpa %s24, 0
    loop: start=0, step=1, limit=4
    $region2: #{tpu_custom_call.1} parent=1 // loop_pre_header
      _
    $region3: #{tpu_custom_call.1} parent=1 // loop_header
      %s27 = sphi 0, %s31
      %p28 = scmp.ge.s32.totalorder %s27, 4
      %s37 = sphi 0, %s39
      %s40 = sphi 0, %s37
      %s41 = sphi 0, %s40
      %s57 = sphi 0, %s41
      %s61 = sphi 0, %s61
      %s63 = sphi 0, %s61
      %s64 = sphi 0, %s63
      %s78 = sphi 0, %s64
      %s82 = sphi 0, %s82
      %s84 = sphi 0, %s82
      %s85 = sphi 0, %s84
      %s99 = sphi 0, %s85
      %s103 = sphi 0, %s103
      %s105 = sphi 0, %s103
      %s106 = sphi 0, %s105
      %s120 = sphi 0, %s106
      %s124 = sphi 0, %s124
      %s126 = sphi 0, %s124
      %s127 = sphi 0, %s126
      %s141 = sphi 0, %s127
      %s145 = sphi 0, %s145
      %s147 = sphi 0, %s145
      %s148 = sphi 0, %s147
      %s162 = sphi 0, %s148
      %s166 = sphi 0, %s166
      %s168 = sphi 0, %s166
      %s169 = sphi 0, %s168
      %s183 = sphi 0, %s169
      %s187 = sphi 0, %s187
      %s189 = sphi 0, %s187
      %s190 = sphi 0, %s189
      %s204 = sphi 0, %s190
      %s208 = sphi 0, %s208
      %s210 = sphi 0, %s208
      %s211 = sphi 0, %s210
      %s225 = sphi 0, %s211
      %s229 = sphi 0, %s229
      %s231 = sphi 0, %s229
      %s232 = sphi 0, %s231
      %s246 = sphi 0, %s232
      %s250 = sphi 0, %s250
      %s252 = sphi 0, %s250
      %s253 = sphi 0, %s252
      %s267 = sphi 0, %s253
      %s271 = sphi 0, %s271
      %s273 = sphi 0, %s271
      %s274 = sphi 0, %s273
      %s288 = sphi 0, %s274
      %s292 = sphi 0, %s292
      %s294 = sphi 0, %s292
      %s295 = sphi 0, %s294
      %s309 = sphi 0, %s295
      %s313 = sphi 0, %s313
      %s315 = sphi 0, %s313
      %s316 = sphi 0, %s315
      %s330 = sphi 0, %s316
      %s334 = sphi 0, %s334
      %s336 = sphi 0, %s334
      %s337 = sphi 0, %s336
      %s351 = sphi 0, %s337
      %s357 = sphi 0, %s359
      %s360 = sphi 0, %s357
      %s361 = sphi 0, %s360
      %s377 = sphi 0, %s361
    $region4: #{tpu_custom_call.1} parent=1 // loop_header_branch
      %30 = sbr.rel (%p28) target = $region8
    $region5: #{tpu_custom_call.1} parent=1 // loop_body
      %s32 = ssub.s32 %s27, 1
      %s33 = ssub.s32 %s27, 2
      %s34 = sadd.s32 %s27, 1
      %s35 = ssub.s32 %s27, %s34
      %p36 = scmp.eq.s32.totalorder %s35, 0
      %s38 = sadd.s32 %s37, 1
      %s39 = scalar_select %p36, %s37, %s38
      %p42 = pneg %p36
      %p43 = scmp.eq.s32.totalorder %s27, 1
      %p44 = por %p42, %p43
      %p45 = scmp.ne.s32.totalorder %s37, %s40
      %p46 = scmp.eq.s32.totalorder %s27, 0
      %p47 = por %p45, %p46
      %p48 = scmp.ne.s32.totalorder %s37, %s40
      %p49 = scmp.eq.s32.totalorder %s32, 1
      %p50 = por %p48, %p49
      %p51 = scmp.ne.s32.totalorder %s40, %s41
      %p52 = scmp.eq.s32.totalorder %s32, 0
      %p53 = por %p51, %p52
      %p54 = scmp.ne.s32.totalorder %s40, %s41
      %p55 = scmp.eq.s32.totalorder %s33, 1
      %p56 = por %p54, %p55
      %p58 = scmp.ne.s32.totalorder %s41, %s57
      %p59 = scmp.eq.s32.totalorder %s33, 0
      %p60 = por %p58, %p59
      %s62 = sadd.s32 %s61, 1
      %p65 = scmp.eq.s32.totalorder %s27, 1
      %p66 = scmp.ne.s32.totalorder %s61, %s63
      %p67 = scmp.eq.s32.totalorder %s27, 0
      %p68 = por %p66, %p67
      %p69 = scmp.ne.s32.totalorder %s61, %s63
      %p70 = scmp.eq.s32.totalorder %s32, 1
      %p71 = por %p69, %p70
      %p72 = scmp.ne.s32.totalorder %s63, %s64
      %p73 = scmp.eq.s32.totalorder %s32, 0
      %p74 = por %p72, %p73
      %p75 = scmp.ne.s32.totalorder %s63, %s64
      %p76 = scmp.eq.s32.totalorder %s33, 1
      %p77 = por %p75, %p76
      %p79 = scmp.ne.s32.totalorder %s64, %s78
      %p80 = scmp.eq.s32.totalorder %s33, 0
      %p81 = por %p79, %p80
      %s83 = sadd.s32 %s82, 1
      %p86 = scmp.eq.s32.totalorder %s27, 1
      %p87 = scmp.ne.s32.totalorder %s82, %s84
      %p88 = scmp.eq.s32.totalorder %s27, 0
      %p89 = por %p87, %p88
      %p90 = scmp.ne.s32.totalorder %s82, %s84
      %p91 = scmp.eq.s32.totalorder %s32, 1
      %p92 = por %p90, %p91
      %p93 = scmp.ne.s32.totalorder %s84, %s85
      %p94 = scmp.eq.s32.totalorder %s32, 0
      %p95 = por %p93, %p94
      %p96 = scmp.ne.s32.totalorder %s84, %s85
      %p97 = scmp.eq.s32.totalorder %s33, 1
      %p98 = por %p96, %p97
      %p100 = scmp.ne.s32.totalorder %s85, %s99
      %p101 = scmp.eq.s32.totalorder %s33, 0
      %p102 = por %p100, %p101
      %s104 = sadd.s32 %s103, 1
      %p107 = scmp.eq.s32.totalorder %s27, 1
      %p108 = scmp.ne.s32.totalorder %s103, %s105
      %p109 = scmp.eq.s32.totalorder %s27, 0
      %p110 = por %p108, %p109
      %p111 = scmp.ne.s32.totalorder %s103, %s105
      %p112 = scmp.eq.s32.totalorder %s32, 1
      %p113 = por %p111, %p112
      %p114 = scmp.ne.s32.totalorder %s105, %s106
      %p115 = scmp.eq.s32.totalorder %s32, 0
      %p116 = por %p114, %p115
      %p117 = scmp.ne.s32.totalorder %s105, %s106
      %p118 = scmp.eq.s32.totalorder %s33, 1
      %p119 = por %p117, %p118
      %p121 = scmp.ne.s32.totalorder %s106, %s120
      %p122 = scmp.eq.s32.totalorder %s33, 0
      %p123 = por %p121, %p122
      %s125 = sadd.s32 %s124, 1
      %p128 = scmp.eq.s32.totalorder %s27, 1
      %p129 = scmp.ne.s32.totalorder %s124, %s126
      %p130 = scmp.eq.s32.totalorder %s27, 0
      %p131 = por %p129, %p130
      %p132 = scmp.ne.s32.totalorder %s124, %s126
      %p133 = scmp.eq.s32.totalorder %s32, 1
      %p134 = por %p132, %p133
      %p135 = scmp.ne.s32.totalorder %s126, %s127
      %p136 = scmp.eq.s32.totalorder %s32, 0
      %p137 = por %p135, %p136
      %p138 = scmp.ne.s32.totalorder %s126, %s127
      %p139 = scmp.eq.s32.totalorder %s33, 1
      %p140 = por %p138, %p139
      %p142 = scmp.ne.s32.totalorder %s127, %s141
      %p143 = scmp.eq.s32.totalorder %s33, 0
      %p144 = por %p142, %p143
      %s146 = sadd.s32 %s145, 1
      %p149 = scmp.eq.s32.totalorder %s27, 1
      %p150 = scmp.ne.s32.totalorder %s145, %s147
      %p151 = scmp.eq.s32.totalorder %s27, 0
      %p152 = por %p150, %p151
      %p153 = scmp.ne.s32.totalorder %s145, %s147
      %p154 = scmp.eq.s32.totalorder %s32, 1
      %p155 = por %p153, %p154
      %p156 = scmp.ne.s32.totalorder %s147, %s148
      %p157 = scmp.eq.s32.totalorder %s32, 0
      %p158 = por %p156, %p157
      %p159 = scmp.ne.s32.totalorder %s147, %s148
      %p160 = scmp.eq.s32.totalorder %s33, 1
      %p161 = por %p159, %p160
      %p163 = scmp.ne.s32.totalorder %s148, %s162
      %p164 = scmp.eq.s32.totalorder %s33, 0
      %p165 = por %p163, %p164
      %s167 = sadd.s32 %s166, 1
      %p170 = scmp.eq.s32.totalorder %s27, 1
      %p171 = scmp.ne.s32.totalorder %s166, %s168
      %p172 = scmp.eq.s32.totalorder %s27, 0
      %p173 = por %p171, %p172
      %p174 = scmp.ne.s32.totalorder %s166, %s168
      %p175 = scmp.eq.s32.totalorder %s32, 1
      %p176 = por %p174, %p175
      %p177 = scmp.ne.s32.totalorder %s168, %s169
      %p178 = scmp.eq.s32.totalorder %s32, 0
      %p179 = por %p177, %p178
      %p180 = scmp.ne.s32.totalorder %s168, %s169
      %p181 = scmp.eq.s32.totalorder %s33, 1
      %p182 = por %p180, %p181
      %p184 = scmp.ne.s32.totalorder %s169, %s183
      %p185 = scmp.eq.s32.totalorder %s33, 0
      %p186 = por %p184, %p185
      %s188 = sadd.s32 %s187, 1
      %p191 = scmp.eq.s32.totalorder %s27, 1
      %p192 = scmp.ne.s32.totalorder %s187, %s189
      %p193 = scmp.eq.s32.totalorder %s27, 0
      %p194 = por %p192, %p193
      %p195 = scmp.ne.s32.totalorder %s187, %s189
      %p196 = scmp.eq.s32.totalorder %s32, 1
      %p197 = por %p195, %p196
      %p198 = scmp.ne.s32.totalorder %s189, %s190
      %p199 = scmp.eq.s32.totalorder %s32, 0
      %p200 = por %p198, %p199
      %p201 = scmp.ne.s32.totalorder %s189, %s190
      %p202 = scmp.eq.s32.totalorder %s33, 1
      %p203 = por %p201, %p202
      %p205 = scmp.ne.s32.totalorder %s190, %s204
      %p206 = scmp.eq.s32.totalorder %s33, 0
      %p207 = por %p205, %p206
      %s209 = sadd.s32 %s208, 1
      %p212 = scmp.eq.s32.totalorder %s27, 1
      %p213 = scmp.ne.s32.totalorder %s208, %s210
      %p214 = scmp.eq.s32.totalorder %s27, 0
      %p215 = por %p213, %p214
      %p216 = scmp.ne.s32.totalorder %s208, %s210
      %p217 = scmp.eq.s32.totalorder %s32, 1
      %p218 = por %p216, %p217
      %p219 = scmp.ne.s32.totalorder %s210, %s211
      %p220 = scmp.eq.s32.totalorder %s32, 0
      %p221 = por %p219, %p220
      %p222 = scmp.ne.s32.totalorder %s210, %s211
      %p223 = scmp.eq.s32.totalorder %s33, 1
      %p224 = por %p222, %p223
      %p226 = scmp.ne.s32.totalorder %s211, %s225
      %p227 = scmp.eq.s32.totalorder %s33, 0
      %p228 = por %p226, %p227
      %s230 = sadd.s32 %s229, 1
      %p233 = scmp.eq.s32.totalorder %s27, 1
      %p234 = scmp.ne.s32.totalorder %s229, %s231
      %p235 = scmp.eq.s32.totalorder %s27, 0
      %p236 = por %p234, %p235
      %p237 = scmp.ne.s32.totalorder %s229, %s231
      %p238 = scmp.eq.s32.totalorder %s32, 1
      %p239 = por %p237, %p238
      %p240 = scmp.ne.s32.totalorder %s231, %s232
      %p241 = scmp.eq.s32.totalorder %s32, 0
      %p242 = por %p240, %p241
      %p243 = scmp.ne.s32.totalorder %s231, %s232
      %p244 = scmp.eq.s32.totalorder %s33, 1
      %p245 = por %p243, %p244
      %p247 = scmp.ne.s32.totalorder %s232, %s246
      %p248 = scmp.eq.s32.totalorder %s33, 0
      %p249 = por %p247, %p248
      %s251 = sadd.s32 %s250, 1
      %p254 = scmp.eq.s32.totalorder %s27, 1
      %p255 = scmp.ne.s32.totalorder %s250, %s252
      %p256 = scmp.eq.s32.totalorder %s27, 0
      %p257 = por %p255, %p256
      %p258 = scmp.ne.s32.totalorder %s250, %s252
      %p259 = scmp.eq.s32.totalorder %s32, 1
      %p260 = por %p258, %p259
      %p261 = scmp.ne.s32.totalorder %s252, %s253
      %p262 = scmp.eq.s32.totalorder %s32, 0
      %p263 = por %p261, %p262
      %p264 = scmp.ne.s32.totalorder %s252, %s253
      %p265 = scmp.eq.s32.totalorder %s33, 1
      %p266 = por %p264, %p265
      %p268 = scmp.ne.s32.totalorder %s253, %s267
      %p269 = scmp.eq.s32.totalorder %s33, 0
      %p270 = por %p268, %p269
      %s272 = sadd.s32 %s271, 1
      %p275 = scmp.eq.s32.totalorder %s27, 1
      %p276 = scmp.ne.s32.totalorder %s271, %s273
      %p277 = scmp.eq.s32.totalorder %s27, 0
      %p278 = por %p276, %p277
      %p279 = scmp.ne.s32.totalorder %s271, %s273
      %p280 = scmp.eq.s32.totalorder %s32, 1
      %p281 = por %p279, %p280
      %p282 = scmp.ne.s32.totalorder %s273, %s274
      %p283 = scmp.eq.s32.totalorder %s32, 0
      %p284 = por %p282, %p283
      %p285 = scmp.ne.s32.totalorder %s273, %s274
      %p286 = scmp.eq.s32.totalorder %s33, 1
      %p287 = por %p285, %p286
      %p289 = scmp.ne.s32.totalorder %s274, %s288
      %p290 = scmp.eq.s32.totalorder %s33, 0
      %p291 = por %p289, %p290
      %s293 = sadd.s32 %s292, 1
      %p296 = scmp.eq.s32.totalorder %s27, 1
      %p297 = scmp.ne.s32.totalorder %s292, %s294
      %p298 = scmp.eq.s32.totalorder %s27, 0
      %p299 = por %p297, %p298
      %p300 = scmp.ne.s32.totalorder %s292, %s294
      %p301 = scmp.eq.s32.totalorder %s32, 1
      %p302 = por %p300, %p301
      %p303 = scmp.ne.s32.totalorder %s294, %s295
      %p304 = scmp.eq.s32.totalorder %s32, 0
      %p305 = por %p303, %p304
      %p306 = scmp.ne.s32.totalorder %s294, %s295
      %p307 = scmp.eq.s32.totalorder %s33, 1
      %p308 = por %p306, %p307
      %p310 = scmp.ne.s32.totalorder %s295, %s309
      %p311 = scmp.eq.s32.totalorder %s33, 0
      %p312 = por %p310, %p311
      %s314 = sadd.s32 %s313, 1
      %p317 = scmp.eq.s32.totalorder %s27, 1
      %p318 = scmp.ne.s32.totalorder %s313, %s315
      %p319 = scmp.eq.s32.totalorder %s27, 0
      %p320 = por %p318, %p319
      %p321 = scmp.ne.s32.totalorder %s313, %s315
      %p322 = scmp.eq.s32.totalorder %s32, 1
      %p323 = por %p321, %p322
      %p324 = scmp.ne.s32.totalorder %s315, %s316
      %p325 = scmp.eq.s32.totalorder %s32, 0
      %p326 = por %p324, %p325
      %p327 = scmp.ne.s32.totalorder %s315, %s316
      %p328 = scmp.eq.s32.totalorder %s33, 1
      %p329 = por %p327, %p328
      %p331 = scmp.ne.s32.totalorder %s316, %s330
      %p332 = scmp.eq.s32.totalorder %s33, 0
      %p333 = por %p331, %p332
      %s335 = sadd.s32 %s334, 1
      %p338 = scmp.eq.s32.totalorder %s27, 1
      %p339 = scmp.ne.s32.totalorder %s334, %s336
      %p340 = scmp.eq.s32.totalorder %s27, 0
      %p341 = por %p339, %p340
      %p342 = scmp.ne.s32.totalorder %s334, %s336
      %p343 = scmp.eq.s32.totalorder %s32, 1
      %p344 = por %p342, %p343
      %p345 = scmp.ne.s32.totalorder %s336, %s337
      %p346 = scmp.eq.s32.totalorder %s32, 0
      %p347 = por %p345, %p346
      %p348 = scmp.ne.s32.totalorder %s336, %s337
      %p349 = scmp.eq.s32.totalorder %s33, 1
      %p350 = por %p348, %p349
      %p352 = scmp.ne.s32.totalorder %s337, %s351
      %p353 = scmp.eq.s32.totalorder %s33, 0
      %p354 = por %p352, %p353
      %s355 = ssub.s32 %s27, %s34
      %p356 = scmp.eq.s32.totalorder %s355, 0
      %s358 = sadd.s32 %s357, 1
      %s359 = scalar_select %p356, %s357, %s358
      %p362 = pneg %p356
      %p363 = scmp.eq.s32.totalorder %s27, 1
      %p364 = por %p362, %p363
      %p365 = scmp.ne.s32.totalorder %s357, %s360
      %p366 = scmp.eq.s32.totalorder %s27, 0
      %p367 = por %p365, %p366
      %p368 = scmp.ne.s32.totalorder %s357, %s360
      %p369 = scmp.eq.s32.totalorder %s32, 1
      %p370 = por %p368, %p369
      %p371 = scmp.ne.s32.totalorder %s360, %s361
      %p372 = scmp.eq.s32.totalorder %s32, 0
      %p373 = por %p371, %p372
      %p374 = scmp.ne.s32.totalorder %s360, %s361
      %p375 = scmp.eq.s32.totalorder %s33, 1
      %p376 = por %p374, %p375
      %p378 = scmp.ne.s32.totalorder %s361, %s377
      %p379 = scmp.eq.s32.totalorder %s33, 0
      %p380 = por %p378, %p379
      %p381 = scmp.le.s32.totalorder 1, %s27
      %p382 = scmp.lt.s32.totalorder %s27, 3
      %p383 = pnand %p381, %p382
      %p384 = pneg %p383
      // Predicated region
      $region9: #{tpu_custom_call.1} parent=5 // pred_check
        _
      $region10: #{tpu_custom_call.1} parent=5 // pred_check_branch
        %386 = sbr.rel (%p383) target = $region12
      $region11: #{tpu_custom_call.1} parent=5 // pred_region
        %s387 = ssub.s32 %s27, 1
        // Predicated region
        $region13: #{tpu_custom_call.1} parent=11 // pred_check
          %p388 = pneg %p74
        $region14: #{tpu_custom_call.1} parent=11 // pred_check_branch
          %390 = sbr.rel (%p388) target = $region16
        $region15: #{tpu_custom_call.1} parent=11 // pred_region
          _
        $region16: #{tpu_custom_call.1} parent=11 // pred_fallthru
          _
        // Predicated region
        $region17: #{tpu_custom_call.1} parent=11 // pred_check
          %p391 = pneg %p95
        $region18: #{tpu_custom_call.1} parent=11 // pred_check_branch
          %393 = sbr.rel (%p391) target = $region20
        $region19: #{tpu_custom_call.1} parent=11 // pred_region
          _
        $region20: #{tpu_custom_call.1} parent=11 // pred_fallthru
          _
        // Predicated region
        $region21: #{tpu_custom_call.1} parent=11 // pred_check
          %p394 = pneg %p116
        $region22: #{tpu_custom_call.1} parent=11 // pred_check_branch
          %396 = sbr.rel (%p394) target = $region24
        $region23: #{tpu_custom_call.1} parent=11 // pred_region
          _
        $region24: #{tpu_custom_call.1} parent=11 // pred_fallthru
          _
        // Predicated region
        $region25: #{tpu_custom_call.1} parent=11 // pred_check
          %p397 = pneg %p137
        $region26: #{tpu_custom_call.1} parent=11 // pred_check_branch
          %399 = sbr.rel (%p397) target = $region28
        $region27: #{tpu_custom_call.1} parent=11 // pred_region
          _
        $region28: #{tpu_custom_call.1} parent=11 // pred_fallthru
          _
        // Predicated region
        $region29: #{tpu_custom_call.1} parent=11 // pred_check
          %p400 = pneg %p158
        $region30: #{tpu_custom_call.1} parent=11 // pred_check_branch
          %402 = sbr.rel (%p400) target = $region32
        $region31: #{tpu_custom_call.1} parent=11 // pred_region
          _
        $region32: #{tpu_custom_call.1} parent=11 // pred_fallthru
          _
        // Predicated region
        $region33: #{tpu_custom_call.1} parent=11 // pred_check
          %p403 = pneg %p179
        $region34: #{tpu_custom_call.1} parent=11 // pred_check_branch
          %405 = sbr.rel (%p403) target = $region36
        $region35: #{tpu_custom_call.1} parent=11 // pred_region
          _
        $region36: #{tpu_custom_call.1} parent=11 // pred_fallthru
          _
        // Predicated region
        $region37: #{tpu_custom_call.1} parent=11 // pred_check
          %p406 = pneg %p200
        $region38: #{tpu_custom_call.1} parent=11 // pred_check_branch
          %408 = sbr.rel (%p406) target = $region40
        $region39: #{tpu_custom_call.1} parent=11 // pred_region
          _
        $region40: #{tpu_custom_call.1} parent=11 // pred_fallthru
          _
        // Predicated region
        $region41: #{tpu_custom_call.1} parent=11 // pred_check
          %p409 = pneg %p221
        $region42: #{tpu_custom_call.1} parent=11 // pred_check_branch
          %411 = sbr.rel (%p409) target = $region44
        $region43: #{tpu_custom_call.1} parent=11 // pred_region
          _
        $region44: #{tpu_custom_call.1} parent=11 // pred_fallthru
          _
        // Predicated region
        $region45: #{tpu_custom_call.1} parent=11 // pred_check
          %p412 = pneg %p242
        $region46: #{tpu_custom_call.1} parent=11 // pred_check_branch
          %414 = sbr.rel (%p412) target = $region48
        $region47: #{tpu_custom_call.1} parent=11 // pred_region
          _
        $region48: #{tpu_custom_call.1} parent=11 // pred_fallthru
          _
        // Predicated region
        $region49: #{tpu_custom_call.1} parent=11 // pred_check
          %p415 = pneg %p263
        $region50: #{tpu_custom_call.1} parent=11 // pred_check_branch
          %417 = sbr.rel (%p415) target = $region52
        $region51: #{tpu_custom_call.1} parent=11 // pred_region
          _
        $region52: #{tpu_custom_call.1} parent=11 // pred_fallthru
          _
        // Predicated region
        $region53: #{tpu_custom_call.1} parent=11 // pred_check
          %p418 = pneg %p284
        $region54: #{tpu_custom_call.1} parent=11 // pred_check_branch
          %420 = sbr.rel (%p418) target = $region56
        $region55: #{tpu_custom_call.1} parent=11 // pred_region
          _
        $region56: #{tpu_custom_call.1} parent=11 // pred_fallthru
          _
        // Predicated region
        $region57: #{tpu_custom_call.1} parent=11 // pred_check
          %p421 = pneg %p305
        $region58: #{tpu_custom_call.1} parent=11 // pred_check_branch
          %423 = sbr.rel (%p421) target = $region60
        $region59: #{tpu_custom_call.1} parent=11 // pred_region
          _
        $region60: #{tpu_custom_call.1} parent=11 // pred_fallthru
          _
        // Predicated region
        $region61: #{tpu_custom_call.1} parent=11 // pred_check
          %p424 = pneg %p326
        $region62: #{tpu_custom_call.1} parent=11 // pred_check_branch
          %426 = sbr.rel (%p424) target = $region64
        $region63: #{tpu_custom_call.1} parent=11 // pred_region
          _
        $region64: #{tpu_custom_call.1} parent=11 // pred_fallthru
          _
        // Predicated region
        $region65: #{tpu_custom_call.1} parent=11 // pred_check
          %p427 = pneg %p347
        $region66: #{tpu_custom_call.1} parent=11 // pred_check_branch
          %429 = sbr.rel (%p427) target = $region68
        $region67: #{tpu_custom_call.1} parent=11 // pred_region
          _
        $region68: #{tpu_custom_call.1} parent=11 // pred_fallthru
          _
      $region12: #{tpu_custom_call.1} parent=5 // pred_fallthru
        _
      %p430 = scmp.lt.s32.totalorder %s27, 2
      // Predicated region
      $region69: #{tpu_custom_call.1} parent=5 // pred_check
        %p431 = pneg %p430
      $region70: #{tpu_custom_call.1} parent=5 // pred_check_branch
        %433 = sbr.rel (%p431) target = $region72
      $region71: #{tpu_custom_call.1} parent=5 // pred_region
        // Predicated region
        $region73: #{tpu_custom_call.1} parent=71 // pred_check
          %p434 = pneg %p47
        $region74: #{tpu_custom_call.1} parent=71 // pred_check_branch
          %436 = sbr.rel (%p434) target = $region76
        $region75: #{tpu_custom_call.1} parent=71 // pred_region
          %s437 = sand.u32 %s37, 1
          %s438 = scalar_lea.sflag [#allocation3], %s437
          %s439 = sand.u32 %s37, 1
          %s440 = smul.addr %s439, 64
          %s441 = scalar_lea.vmem [#allocation2], %s440
          %443 = vsyncadd %s438, 0
          %s444 = smul.addr %s27, 8
          %s445 = smul.addr %s444, 8
          %s446 = scalar_lea.hbm %s0, %s445
          %s447 = sshll.u32 %s446, 4
          %s448 = int_to_ptr.hbm [resolvable:$true] %s447
          %s449 = sshll.u32 %s441, 4
          %s450 = int_to_ptr.vmem [resolvable:$true] %s449
          %455 = dma.hbm_to_vmem [thread:$0]  %s448, 1024, %s450, %s438, 256, 256, 16
        $region76: #{tpu_custom_call.1} parent=71 // pred_fallthru
          _
      $region72: #{tpu_custom_call.1} parent=5 // pred_fallthru
        _
      %p456 = scmp.le.s32.totalorder 1, %s27
      %p457 = scmp.lt.s32.totalorder %s27, 3
      %p458 = pnand %p456, %p457
      %p459 = pneg %p458
      // Predicated region
      $region77: #{tpu_custom_call.1} parent=5 // pred_check
        _
      $region78: #{tpu_custom_call.1} parent=5 // pred_check_branch
        %461 = sbr.rel (%p458) target = $region80
      $region79: #{tpu_custom_call.1} parent=5 // pred_region
        %s462 = ssub.s32 %s27, 1
        %s463 = sand.u32 %s40, 1
        %s464 = scalar_lea.sflag [#allocation3], %s463
        %s465 = sand.u32 %s40, 1
        %s466 = smul.addr %s465, 64
        %s467 = scalar_lea.vmem [#allocation2], %s466
        // Predicated region
        $region81: #{tpu_custom_call.1} parent=79 // pred_check
          %p468 = pneg %p53
        $region82: #{tpu_custom_call.1} parent=79 // pred_check_branch
          %470 = sbr.rel (%p468) target = $region84
        $region83: #{tpu_custom_call.1} parent=79 // pred_region
          %472 = dma.done %s464, 1024
        $region84: #{tpu_custom_call.1} parent=79 // pred_fallthru
          _
        %s473 = sand.u32 %s40, 1
        %s474 = scalar_lea.sflag [#allocation3], %s473
        %s475 = sand.u32 %s40, 1
        %s476 = smul.addr %s475, 64
        %s477 = scalar_lea.vmem [#allocation2], %s476
        %p478 = pneg %p53
        %p479 = pneg %p50
        %p480 = pneg %p74
        %p481 = pneg %p71
        %p482 = pneg %p95
        %p483 = pneg %p92
        %p484 = pneg %p116
        %p485 = pneg %p113
        %p486 = pneg %p137
        %p487 = pneg %p134
        %p488 = pneg %p158
        %p489 = pneg %p155
        %p490 = pneg %p179
        %p491 = pneg %p176
        %p492 = pneg %p200
        %p493 = pneg %p197
        %p494 = pneg %p221
        %p495 = pneg %p218
        %p496 = pneg %p242
        %p497 = pneg %p239
        %p498 = pneg %p263
        %p499 = pneg %p260
        %p500 = pneg %p284
        %p501 = pneg %p281
        %p502 = pneg %p305
        %p503 = pneg %p302
        %p504 = pneg %p326
        %p505 = pneg %p323
        %p506 = pneg %p347
        %p507 = pneg %p344
        %p508 = pneg %p373
        %p509 = pneg %p370
        %s510 = sand.u32 %s360, 1
        %s511 = scalar_lea.sflag [#allocation4], %s510
        %s512 = sand.u32 %s360, 1
        %s513 = smul.addr %s512, 48
        %s514 = scalar_lea.vmem [#allocation5], %s513
        %v515 = vld [vmem:[%s467] sm:$0xff]
        %v516 = vld [vmem:[%s467 + $0x8] sm:$0xff]
        %v517 = vld [vmem:[%s467 + $0x10] sm:$0xff]
        %v518 = vld [vmem:[%s467 + $0x18] sm:$0xff]
        %v519 = vld [vmem:[%s467 + $0x20] sm:$0xff]
        %v520 = vld [vmem:[%s467 + $0x28] sm:$0xff]
        %v521 = vld [vmem:[%s467 + $0x30] sm:$0xff]
        %v522 = vld [vmem:[%s467 + $0x38] sm:$0xff]
        %v523 = vld [vmem:[%s2] sm:$0xff]
        %v524 = vld [vmem:[%s2 + $0x8] sm:$0xff]
        %v525 = vld [vmem:[%s2 + $0x10] sm:$0x1]
        %v526 = vld [vmem:[%s2 + $0x18] sm:$0x1]
        %v527 = vld [vmem:[%s3] sm:$0xff]
        %v528 = vld [vmem:[%s3 + $0x8] sm:$0xff]
        %v529 = vld [vmem:[%s3 + $0x10] sm:$0xff]
        %v530 = vld [vmem:[%s3 + $0x18] sm:$0xff]
        %v531 = vld [vmem:[%s4] sm:$0xff]
        %v532 = vld [vmem:[%s4 + $0x8] sm:$0xff]
        %v533 = vld [vmem:[%s4 + $0x10] sm:$0xff]
        %v534 = vld [vmem:[%s4 + $0x18] sm:$0xff]
        %v535 = vadd.f32 %v515, %v517
        %v536 = vadd.f32 %v535, %v519
        %v537 = vadd.f32 %v536, %v521
        %v538 = vrot.slane %v537, 4
        %v539 = vadd.f32 %v537, %v538
        %v540 = vrot.slane %v539, 2
        %v541 = vadd.f32 %v539, %v540
        %v542 = vrot.slane %v541, 1
        %v543 = vadd.f32 %v541, %v542
        %v544 = vadd.f32 %v516, %v518
        %v545 = vadd.f32 %v544, %v520
        %v546 = vadd.f32 %v545, %v522
        %v547 = vrot.slane %v546, 4
        %v548 = vadd.f32 %v546, %v547
        %v549 = vrot.slane %v548, 2
        %v550 = vadd.f32 %v548, %v549
        %v551 = vrot.slane %v550, 1
        %v552 = vadd.f32 %v550, %v551
        %v553 = vrcp.pop 32.0
        %v554 = vmul.f32 32.0, %v553
        %v555 = vsub.f32 1.0, %v554
        %v556 = vmul.f32 %v553, %v555
        %v557 = vadd.f32 %v553, %v556
        %vm558 = vweird.f32 %v553
        %v559 = vsel %vm558, %v553, %v557
        %v560 = vmul.f32 %v543, %v559
        %v561 = vmul.f32 %v552, %v559
        %v562 = vsub.f32 %v515, %v560
        %v563 = vsub.f32 %v516, %v561
        %v564 = vsub.f32 %v517, %v560
        %v565 = vsub.f32 %v518, %v561
        %v566 = vsub.f32 %v519, %v560
        %v567 = vsub.f32 %v520, %v561
        %v568 = vsub.f32 %v521, %v560
        %v569 = vsub.f32 %v522, %v561
        %v570 = vmul.f32 %v562, %v562
        %v571 = vmul.f32 %v563, %v563
        %v572 = vmul.f32 %v564, %v564
        %v573 = vmul.f32 %v565, %v565
        %v574 = vmul.f32 %v566, %v566
        %v575 = vmul.f32 %v567, %v567
        %v576 = vmul.f32 %v568, %v568
        %v577 = vmul.f32 %v569, %v569
        %v578 = vadd.f32 %v570, %v572
        %v579 = vadd.f32 %v578, %v574
        %v580 = vadd.f32 %v579, %v576
        %v581 = vrot.slane %v580, 4
        %v582 = vadd.f32 %v580, %v581
        %v583 = vrot.slane %v582, 2
        %v584 = vadd.f32 %v582, %v583
        %v585 = vrot.slane %v584, 1
        %v586 = vadd.f32 %v584, %v585
        %v587 = vadd.f32 %v571, %v573
        %v588 = vadd.f32 %v587, %v575
        %v589 = vadd.f32 %v588, %v577
        %v590 = vrot.slane %v589, 4
        %v591 = vadd.f32 %v589, %v590
        %v592 = vrot.slane %v591, 2
        %v593 = vadd.f32 %v591, %v592
        %v594 = vrot.slane %v593, 1
        %v595 = vadd.f32 %v593, %v594
        %v596 = vmul.f32 %v586, %v559
        %v597 = vmul.f32 %v595, %v559
        %v598 = vadd.f32 %v596, 1e-06
        %v599 = vadd.f32 %v597, 1e-06
        %v600 = vrsqrt.pop %v598
        %v601 = vmul.f32 %v600, %v598
        %v602 = vmul.f32 %v601, %v600
        %v603 = vmul.f32 0.5, %v602
        %v604 = vsub.f32 1.5, %v603
        %v605 = vmul.f32 %v600, %v604
        %vm606 = vweird.f32 %v598
        %vm607 = vweird.f32 %v600
        %vm608 = vmor %vm606, %vm607
        %v609 = vsel %vm608, %v600, %v605
        %v610 = vrsqrt.pop %v599
        %v611 = vmul.f32 %v610, %v599
        %v612 = vmul.f32 %v611, %v610
        %v613 = vmul.f32 0.5, %v612
        %v614 = vsub.f32 1.5, %v613
        %v615 = vmul.f32 %v610, %v614
        %vm616 = vweird.f32 %v599
        %vm617 = vweird.f32 %v610
        %vm618 = vmor %vm616, %vm617
        %v619 = vsel %vm618, %v610, %v615
        %v620 = vmul.f32 %v562, %v609
        %v621 = vmul.f32 %v563, %v619
        %v622 = vmul.f32 %v564, %v609
        %v623 = vmul.f32 %v565, %v619
        %v624 = vmul.f32 %v566, %v609
        %v625 = vmul.f32 %v567, %v619
        %v626 = vmul.f32 %v568, %v609
        %v627 = vmul.f32 %v569, %v619
        %629 = vset.pattern.permute.xlu0 0
        %630 = vperm.xlu0 %629, %v527
        %v631 = vpop.permute.xlu0 %630
        %634 = vset.pattern.permute.xlu0 0
        %635 = vperm.xlu0 %634, %v528
        %v636 = vpop.permute.xlu0 %635
        %639 = vset.pattern.permute.xlu0 0
        %640 = vperm.xlu0 %639, %v529
        %v641 = vpop.permute.xlu0 %640
        %644 = vset.pattern.permute.xlu0 0
        %645 = vperm.xlu0 %644, %v530
        %v646 = vpop.permute.xlu0 %645
        %v648 = vmul.f32 %v620, %v631
        %v649 = vmul.f32 %v621, %v631
        %v650 = vmul.f32 %v622, %v636
        %v651 = vmul.f32 %v623, %v636
        %v652 = vmul.f32 %v624, %v641
        %v653 = vmul.f32 %v625, %v641
        %v654 = vmul.f32 %v626, %v646
        %v655 = vmul.f32 %v627, %v646
        %657 = vset.pattern.permute.xlu0 0
        %658 = vperm.xlu0 %657, %v531
        %v659 = vpop.permute.xlu0 %658
        %662 = vset.pattern.permute.xlu0 0
        %663 = vperm.xlu0 %662, %v532
        %v664 = vpop.permute.xlu0 %663
        %667 = vset.pattern.permute.xlu0 0
        %668 = vperm.xlu0 %667, %v533
        %v669 = vpop.permute.xlu0 %668
        %672 = vset.pattern.permute.xlu0 0
        %673 = vperm.xlu0 %672, %v534
        %v674 = vpop.permute.xlu0 %673
        %v676 = vadd.f32 %v648, %v659
        %v677 = vadd.f32 %v649, %v659
        %v678 = vadd.f32 %v650, %v664
        %v679 = vadd.f32 %v651, %v664
        %v680 = vadd.f32 %v652, %v669
        %v681 = vadd.f32 %v653, %v669
        %v682 = vadd.f32 %v654, %v674
        %v683 = vadd.f32 %v655, %v674
        %v684 = vld [vmem:[%s1] sm:$0xff]
        %v685 = vld [vmem:[%s1 + $0x8] sm:$0xff]
        %v686 = vld [vmem:[%s1 + $0x10] sm:$0xff]
        %v687 = vld [vmem:[%s1 + $0x18] sm:$0xff]
        %v688 = vld [vmem:[%s1 + $0x20] sm:$0xff]
        %v689 = vld [vmem:[%s1 + $0x28] sm:$0xff]
        %v690 = vmul.f32 %v676, %v684
        %v691 = vmul.f32 %v677, %v685
        %v692 = vmul.f32 %v678, %v686
        %v693 = vmul.f32 %v679, %v687
        %v694 = vmul.f32 %v680, %v688
        %v695 = vmul.f32 %v681, %v689
        %v696 = vld [vmem:[%s7] sm:$0xff]
        %v697 = vld [vmem:[%s8] sm:$0xff]
        %699 = vset.pattern.permute.xlu0 0
        %700 = vperm.xlu0 %699, %v697
        %v701 = vpop.permute.xlu0 %700
        %vm703 = vcmask 64512
        %v705 = vsel %vm703, %v696, 0
        %707 = vmatpush.msra.mxu0 0.0
        %708 = vmatpush.msra.mxu0 0.0
        %709 = vmatpush.msra.mxu0 0.0
        %710 = vmatpush.msra.mxu0 0.0
        %711 = vmatpush.msra.mxu0 0.0
        %712 = vmatpush.msra.mxu0 0.0
        %713 = vmatpush.msra.mxu0 0.0
        %714 = vmatpush.msra.mxu0 0.0
        %715 = vmatpush.msra.mxu0 0.0
        %716 = vmatpush.msra.mxu0 0.0
        %717 = vmatpush.msra.mxu0 0.0
        %718 = vmatpush.msra.mxu0 0.0
        %719 = vmatpush.msra.mxu0 0.0
        %720 = vmatpush.msra.mxu0 0.0
        %721 = vmatpush.msra.mxu0 0.0
        %722 = vmatpush.msra.mxu0 %v682
        %723 = vmatmul.f32.gmra.mxu0 %v705
        %v724 = vpop.f32.mrf.mxu0
        %v725 = vadd.f32 %v701, %v724
        %726 = vdwg.mxu0
        %727 = vmatpush.msra.mxu0 0.0
        %728 = vmatpush.msra.mxu0 0.0
        %729 = vmatpush.msra.mxu0 0.0
        %730 = vmatpush.msra.mxu0 0.0
        %731 = vmatpush.msra.mxu0 0.0
        %732 = vmatpush.msra.mxu0 0.0
        %733 = vmatpush.msra.mxu0 0.0
        %734 = vmatpush.msra.mxu0 0.0
        %735 = vmatpush.msra.mxu0 0.0
        %736 = vmatpush.msra.mxu0 0.0
        %737 = vmatpush.msra.mxu0 0.0
        %738 = vmatpush.msra.mxu0 0.0
        %739 = vmatpush.msra.mxu0 0.0
        %740 = vmatpush.msra.mxu0 0.0
        %741 = vmatpush.msra.mxu0 0.0
        %742 = vmatpush.msra.mxu0 %v683
        %743 = vmatmul.f32.gmra.mxu0 %v705
        %v744 = vpop.f32.mrf.mxu0
        %v745 = vadd.f32 %v701, %v744
        %746 = vdwg.mxu0
        %v747 = vmul.f32 %v725, 0.5
        %v748 = vmul.f32 %v745, 0.5
        %v749 = vmul.f32 %v725, 0.70710677
        %v750 = vmul.f32 %v745, 0.70710677
        %v751 = vmul.f32 %v749, %v749
        %v752 = vmin.f32 16.0, %v751
        %v753 = vmul.f32 %v752, 2.1237322e-06
        %v754 = vadd.f32 %v753, 0.00028619796
        %v755 = vmul.f32 %v752, %v754
        %v756 = vadd.f32 %v755, 0.0036580483
        %v757 = vmul.f32 %v752, %v756
        %v758 = vadd.f32 %v757, 0.05243302
        %v759 = vmul.f32 %v752, %v758
        %v760 = vadd.f32 %v759, 0.18741608
        %v761 = vmul.f32 %v752, %v760
        %v762 = vadd.f32 %v761, 1.1283791
        %v763 = vmul.f32 %v749, %v762
        %v764 = vmul.f32 %v752, 3.8918573e-05
        %v765 = vadd.f32 %v764, 0.001143296
        %v766 = vmul.f32 %v752, %v765
        %v767 = vadd.f32 %v766, 0.014752088
        %v768 = vmul.f32 %v752, %v767
        %v769 = vadd.f32 %v768, 0.112945676
        %v770 = vmul.f32 %v752, %v769
        %v771 = vadd.f32 %v770, 0.4994258
        %v772 = vmul.f32 %v752, %v771
        %v773 = vadd.f32 %v772, 1.0
        %v774 = vrcp.pop %v773
        %v775 = vmul.f32 %v773, %v774
        %v776 = vsub.f32 1.0, %v775
        %v777 = vmul.f32 %v774, %v776
        %v778 = vadd.f32 %v774, %v777
        %vm779 = vweird.f32 %v773
        %vm780 = vweird.f32 %v774
        %vm781 = vmor %vm779, %vm780
        %v782 = vsel %vm781, %v774, %v778
        %v783 = vand.u32 2147483647, %v773
        %vm784 = vcmp.eq.f32.partialorder %v783, 8.507059e+37
        %v785 = vand.u32 %v773, 2147483648
        %v786 = vor.u32 1.1754944e-38, %v785
        %v787 = vsel %vm784, %v786, %v782
        %v788 = vmul.f32 %v763, %v787
        %v789 = vmin.f32 %v788, 1.0
        %v790 = vmax.f32 %v789, -1.0
        %v791 = vmul.f32 %v750, %v750
        %v792 = vmin.f32 16.0, %v791
        %v793 = vmul.f32 %v792, 2.1237322e-06
        %v794 = vadd.f32 %v793, 0.00028619796
        %v795 = vmul.f32 %v792, %v794
        %v796 = vadd.f32 %v795, 0.0036580483
        %v797 = vmul.f32 %v792, %v796
        %v798 = vadd.f32 %v797, 0.05243302
        %v799 = vmul.f32 %v792, %v798
        %v800 = vadd.f32 %v799, 0.18741608
        %v801 = vmul.f32 %v792, %v800
        %v802 = vadd.f32 %v801, 1.1283791
        %v803 = vmul.f32 %v750, %v802
        %v804 = vmul.f32 %v792, 3.8918573e-05
        %v805 = vadd.f32 %v804, 0.001143296
        %v806 = vmul.f32 %v792, %v805
        %v807 = vadd.f32 %v806, 0.014752088
        %v808 = vmul.f32 %v792, %v807
        %v809 = vadd.f32 %v808, 0.112945676
        %v810 = vmul.f32 %v792, %v809
        %v811 = vadd.f32 %v810, 0.4994258
        %v812 = vmul.f32 %v792, %v811
        %v813 = vadd.f32 %v812, 1.0
        %v814 = vrcp.pop %v813
        %v815 = vmul.f32 %v813, %v814
        %v816 = vsub.f32 1.0, %v815
        %v817 = vmul.f32 %v814, %v816
        %v818 = vadd.f32 %v814, %v817
        %vm819 = vweird.f32 %v813
        %vm820 = vweird.f32 %v814
        %vm821 = vmor %vm819, %vm820
        %v822 = vsel %vm821, %v814, %v818
        %v823 = vand.u32 2147483647, %v813
        %vm824 = vcmp.eq.f32.partialorder %v823, 8.507059e+37
        %v825 = vand.u32 %v813, 2147483648
        %v826 = vor.u32 1.1754944e-38, %v825
        %v827 = vsel %vm824, %v826, %v822
        %v828 = vmul.f32 %v803, %v827
        %v829 = vmin.f32 %v828, 1.0
        %v830 = vmax.f32 %v829, -1.0
        %v831 = vadd.f32 %v790, 1.0
        %v832 = vadd.f32 %v830, 1.0
        %v833 = vmul.f32 %v747, %v831
        %v834 = vmul.f32 %v748, %v832
        %v835 = vld [vmem:[%s9] sm:$0xff]
        %v836 = vld [vmem:[%s10] sm:$0xff]
        %838 = vset.pattern.permute.xlu0 4
        %839 = vperm.xlu0 %838, %v835
        %v840 = vpop.permute.xlu0 %839
        %v842 = vmul.f32 %v833, %v840
        %v843 = vmul.f32 %v834, %v840
        %844 = vrot.lane.b32.xlu0 %v833, 17
        %v845 = vpop.permute.xlu0 %844
        %846 = vrot.lane.b32.xlu0 %v834, 17
        %v847 = vpop.permute.xlu0 %846
        %v848 = vlaneseq
        %v849 = vand.u32 %v848, 127
        %vm850 = vcmp.lt.s32.totalorder %v849, 17
        %v851 = vsel %vm850, %v845, %v847
        %v852 = vsel %vm850, %v847, %v845
        %v853 = vperm.slane %v523, 0
        %v854 = vperm.slane %v524, 0
        %v855 = vmul.f32 %v852, %v853
        %v856 = vmul.f32 %v851, %v854
        %857 = vset.pattern.permute.xlu0 0
        %858 = vperm.xlu0 %857, %v835
        %v859 = vpop.permute.xlu0 %858
        %v861 = vmul.f32 %v855, %v859
        %v862 = vmul.f32 %v856, %v859
        %v863 = vadd.f32 %v842, %v861
        %v864 = vadd.f32 %v843, %v862
        %865 = vrot.lane.b32.xlu0 %v833, 16
        %v866 = vpop.permute.xlu0 %865
        %867 = vrot.lane.b32.xlu0 %v834, 16
        %v868 = vpop.permute.xlu0 %867
        %vm869 = vcmp.lt.s32.totalorder %v849, 16
        %v870 = vsel %vm869, %v866, %v868
        %v871 = vsel %vm869, %v868, %v866
        %v872 = vperm.slane %v523, 1
        %v873 = vperm.slane %v524, 1
        %v874 = vmul.f32 %v871, %v872
        %v875 = vmul.f32 %v870, %v873
        %876 = vset.pattern.permute.xlu0 1
        %877 = vperm.xlu0 %876, %v835
        %v878 = vpop.permute.xlu0 %877
        %v880 = vmul.f32 %v874, %v878
        %v881 = vmul.f32 %v875, %v878
        %v882 = vadd.f32 %v863, %v880
        %v883 = vadd.f32 %v864, %v881
        %884 = vrot.lane.b32.xlu0 %v833, 15
        %v885 = vpop.permute.xlu0 %884
        %886 = vrot.lane.b32.xlu0 %v834, 15
        %v887 = vpop.permute.xlu0 %886
        %vm888 = vcmp.lt.s32.totalorder %v849, 15
        %v889 = vsel %vm888, %v885, %v887
        %v890 = vsel %vm888, %v887, %v885
        %v891 = vperm.slane %v523, 2
        %v892 = vperm.slane %v524, 2
        %v893 = vmul.f32 %v890, %v891
        %v894 = vmul.f32 %v889, %v892
        %895 = vset.pattern.permute.xlu0 2
        %896 = vperm.xlu0 %895, %v835
        %v897 = vpop.permute.xlu0 %896
        %v899 = vmul.f32 %v893, %v897
        %v900 = vmul.f32 %v894, %v897
        %v901 = vadd.f32 %v882, %v899
        %v902 = vadd.f32 %v883, %v900
        %903 = vrot.lane.b32.xlu0 %v833, 1
        %v904 = vpop.permute.xlu0 %903
        %905 = vrot.lane.b32.xlu0 %v834, 1
        %v906 = vpop.permute.xlu0 %905
        %vm907 = vcmp.lt.s32.totalorder %v849, 1
        %v908 = vsel %vm907, %v904, %v906
        %v909 = vsel %vm907, %v906, %v904
        %v910 = vperm.slane %v523, 3
        %v911 = vperm.slane %v524, 3
        %v912 = vmul.f32 %v909, %v910
        %v913 = vmul.f32 %v908, %v911
        %914 = vset.pattern.permute.xlu0 3
        %915 = vperm.xlu0 %914, %v835
        %v916 = vpop.permute.xlu0 %915
        %v918 = vmul.f32 %v912, %v916
        %v919 = vmul.f32 %v913, %v916
        %v920 = vadd.f32 %v901, %v918
        %v921 = vadd.f32 %v902, %v919
        %922 = vrot.lane.b32.xlu0 %v833, 127
        %v923 = vpop.permute.xlu0 %922
        %924 = vrot.lane.b32.xlu0 %v834, 127
        %v925 = vpop.permute.xlu0 %924
        %vm926 = vcmp.lt.s32.totalorder %v849, 127
        %v927 = vsel %vm926, %v923, %v925
        %v928 = vsel %vm926, %v925, %v923
        %v929 = vperm.slane %v523, 5
        %v930 = vperm.slane %v524, 5
        %v931 = vmul.f32 %v927, %v929
        %v932 = vmul.f32 %v928, %v930
        %933 = vset.pattern.permute.xlu0 5
        %934 = vperm.xlu0 %933, %v835
        %v935 = vpop.permute.xlu0 %934
        %v937 = vmul.f32 %v931, %v935
        %v938 = vmul.f32 %v932, %v935
        %v939 = vadd.f32 %v920, %v937
        %v940 = vadd.f32 %v921, %v938
        %941 = vrot.lane.b32.xlu0 %v833, 113
        %v942 = vpop.permute.xlu0 %941
        %943 = vrot.lane.b32.xlu0 %v834, 113
        %v944 = vpop.permute.xlu0 %943
        %vm945 = vcmp.lt.s32.totalorder %v849, 113
        %v946 = vsel %vm945, %v942, %v944
        %v947 = vsel %vm945, %v944, %v942
        %v948 = vperm.slane %v523, 6
        %v949 = vperm.slane %v524, 6
        %v950 = vmul.f32 %v946, %v948
        %v951 = vmul.f32 %v947, %v949
        %952 = vset.pattern.permute.xlu0 6
        %953 = vperm.xlu0 %952, %v835
        %v954 = vpop.permute.xlu0 %953
        %v956 = vmul.f32 %v950, %v954
        %v957 = vmul.f32 %v951, %v954
        %v958 = vadd.f32 %v939, %v956
        %v959 = vadd.f32 %v940, %v957
        %960 = vrot.lane.b32.xlu0 %v833, 112
        %v961 = vpop.permute.xlu0 %960
        %962 = vrot.lane.b32.xlu0 %v834, 112
        %v963 = vpop.permute.xlu0 %962
        %vm964 = vcmp.lt.s32.totalorder %v849, 112
        %v965 = vsel %vm964, %v961, %v963
        %v966 = vsel %vm964, %v963, %v961
        %v967 = vperm.slane %v523, 7
        %v968 = vperm.slane %v524, 7
        %v969 = vmul.f32 %v965, %v967
        %v970 = vmul.f32 %v966, %v968
        %971 = vset.pattern.permute.xlu0 7
        %972 = vperm.xlu0 %971, %v835
        %v973 = vpop.permute.xlu0 %972
        %v975 = vmul.f32 %v969, %v973
        %v976 = vmul.f32 %v970, %v973
        %v977 = vadd.f32 %v958, %v975
        %v978 = vadd.f32 %v959, %v976
        %979 = vrot.lane.b32.xlu0 %v833, 111
        %v980 = vpop.permute.xlu0 %979
        %981 = vrot.lane.b32.xlu0 %v834, 111
        %v982 = vpop.permute.xlu0 %981
        %vm983 = vcmp.lt.s32.totalorder %v849, 111
        %v984 = vsel %vm983, %v980, %v982
        %v985 = vsel %vm983, %v982, %v980
        %v986 = vperm.slane %v525, 0
        %v987 = vperm.slane %v526, 0
        %v988 = vmul.f32 %v984, %v986
        %v989 = vmul.f32 %v985, %v987
        %990 = vset.pattern.permute.xlu0 8
        %991 = vperm.xlu0 %990, %v835
        %v992 = vpop.permute.xlu0 %991
        %v994 = vmul.f32 %v988, %v992
        %v995 = vmul.f32 %v989, %v992
        %v996 = vadd.f32 %v977, %v994
        %v997 = vadd.f32 %v978, %v995
        %999 = vset.pattern.permute.xlu0 0
        %1000 = vperm.xlu0 %999, %v836
        %v1001 = vpop.permute.xlu0 %1000
        %v1003 = vadd.f32 %v996, %v1001
        %v1004 = vadd.f32 %v997, %v1001
        %v1005 = vld [vmem:[%s5] sm:$0xff]
        %v1006 = vld [vmem:[%s5 + $0x8] sm:$0xff]
        %v1007 = vld [vmem:[%s5 + $0x10] sm:$0xff]
        %v1008 = vld [vmem:[%s5 + $0x18] sm:$0xff]
        %v1009 = vld [vmem:[%s6] sm:$0xff]
        %v1010 = vld [vmem:[%s6 + $0x8] sm:$0xff]
        %v1011 = vld [vmem:[%s6 + $0x10] sm:$0xff]
        %v1012 = vld [vmem:[%s6 + $0x18] sm:$0xff]
        %v1013 = vadd.f32 %v690, %v692
        %v1014 = vadd.f32 %v1013, %v694
        %v1015 = vadd.f32 %v1014, %v1003
        %v1016 = vrot.slane %v1015, 4
        %v1017 = vadd.f32 %v1015, %v1016
        %v1018 = vrot.slane %v1017, 2
        %v1019 = vadd.f32 %v1017, %v1018
        %v1020 = vrot.slane %v1019, 1
        %v1021 = vadd.f32 %v1019, %v1020
        %v1022 = vadd.f32 %v691, %v693
        %v1023 = vadd.f32 %v1022, %v695
        %v1024 = vadd.f32 %v1023, %v1004
        %v1025 = vrot.slane %v1024, 4
        %v1026 = vadd.f32 %v1024, %v1025
        %v1027 = vrot.slane %v1026, 2
        %v1028 = vadd.f32 %v1026, %v1027
        %v1029 = vrot.slane %v1028, 1
        %v1030 = vadd.f32 %v1028, %v1029
        %v1031 = vmul.f32 %v1021, %v559
        %v1032 = vmul.f32 %v1030, %v559
        %v1033 = vsub.f32 %v690, %v1031
        %v1034 = vsub.f32 %v691, %v1032
        %v1035 = vsub.f32 %v692, %v1031
        %v1036 = vsub.f32 %v693, %v1032
        %v1037 = vsub.f32 %v694, %v1031
        %v1038 = vsub.f32 %v695, %v1032
        %v1039 = vsub.f32 %v1003, %v1031
        %v1040 = vsub.f32 %v1004, %v1032
        %v1041 = vmul.f32 %v1033, %v1033
        %v1042 = vmul.f32 %v1034, %v1034
        %v1043 = vmul.f32 %v1035, %v1035
        %v1044 = vmul.f32 %v1036, %v1036
        %v1045 = vmul.f32 %v1037, %v1037
        %v1046 = vmul.f32 %v1038, %v1038
        %v1047 = vmul.f32 %v1039, %v1039
        %v1048 = vmul.f32 %v1040, %v1040
        %v1049 = vadd.f32 %v1041, %v1043
        %v1050 = vadd.f32 %v1049, %v1045
        %v1051 = vadd.f32 %v1050, %v1047
        %v1052 = vrot.slane %v1051, 4
        %v1053 = vadd.f32 %v1051, %v1052
        %v1054 = vrot.slane %v1053, 2
        %v1055 = vadd.f32 %v1053, %v1054
        %v1056 = vrot.slane %v1055, 1
        %v1057 = vadd.f32 %v1055, %v1056
        %v1058 = vadd.f32 %v1042, %v1044
        %v1059 = vadd.f32 %v1058, %v1046
        %v1060 = vadd.f32 %v1059, %v1048
        %v1061 = vrot.slane %v1060, 4
        %v1062 = vadd.f32 %v1060, %v1061
        %v1063 = vrot.slane %v1062, 2
        %v1064 = vadd.f32 %v1062, %v1063
        %v1065 = vrot.slane %v1064, 1
        %v1066 = vadd.f32 %v1064, %v1065
        %v1067 = vmul.f32 %v1057, %v559
        %v1068 = vmul.f32 %v1066, %v559
        %v1069 = vadd.f32 %v1067, 1e-06
        %v1070 = vadd.f32 %v1068, 1e-06
        %v1071 = vrsqrt.pop %v1069
        %v1072 = vmul.f32 %v1071, %v1069
        %v1073 = vmul.f32 %v1072, %v1071
        %v1074 = vmul.f32 0.5, %v1073
        %v1075 = vsub.f32 1.5, %v1074
        %v1076 = vmul.f32 %v1071, %v1075
        %vm1077 = vweird.f32 %v1069
        %vm1078 = vweird.f32 %v1071
        %vm1079 = vmor %vm1077, %vm1078
        %v1080 = vsel %vm1079, %v1071, %v1076
        %v1081 = vrsqrt.pop %v1070
        %v1082 = vmul.f32 %v1081, %v1070
        %v1083 = vmul.f32 %v1082, %v1081
        %v1084 = vmul.f32 0.5, %v1083
        %v1085 = vsub.f32 1.5, %v1084
        %v1086 = vmul.f32 %v1081, %v1085
        %vm1087 = vweird.f32 %v1070
        %vm1088 = vweird.f32 %v1081
        %vm1089 = vmor %vm1087, %vm1088
        %v1090 = vsel %vm1089, %v1081, %v1086
        %v1091 = vmul.f32 %v1033, %v1080
        %v1092 = vmul.f32 %v1034, %v1090
        %v1093 = vmul.f32 %v1035, %v1080
        %v1094 = vmul.f32 %v1036, %v1090
        %v1095 = vmul.f32 %v1037, %v1080
        %v1096 = vmul.f32 %v1038, %v1090
        %v1097 = vmul.f32 %v1039, %v1080
        %v1098 = vmul.f32 %v1040, %v1090
        %1100 = vset.pattern.permute.xlu0 0
        %1101 = vperm.xlu0 %1100, %v1005
        %v1102 = vpop.permute.xlu0 %1101
        %1105 = vset.pattern.permute.xlu0 0
        %1106 = vperm.xlu0 %1105, %v1006
        %v1107 = vpop.permute.xlu0 %1106
        %1110 = vset.pattern.permute.xlu0 0
        %1111 = vperm.xlu0 %1110, %v1007
        %v1112 = vpop.permute.xlu0 %1111
        %1115 = vset.pattern.permute.xlu0 0
        %1116 = vperm.xlu0 %1115, %v1008
        %v1117 = vpop.permute.xlu0 %1116
        %v1119 = vmul.f32 %v1091, %v1102
        %v1120 = vmul.f32 %v1092, %v1102
        %v1121 = vmul.f32 %v1093, %v1107
        %v1122 = vmul.f32 %v1094, %v1107
        %v1123 = vmul.f32 %v1095, %v1112
        %v1124 = vmul.f32 %v1096, %v1112
        %v1125 = vmul.f32 %v1097, %v1117
        %v1126 = vmul.f32 %v1098, %v1117
        %1128 = vset.pattern.permute.xlu0 0
        %1129 = vperm.xlu0 %1128, %v1009
        %v1130 = vpop.permute.xlu0 %1129
        %1133 = vset.pattern.permute.xlu0 0
        %1134 = vperm.xlu0 %1133, %v1010
        %v1135 = vpop.permute.xlu0 %1134
        %1138 = vset.pattern.permute.xlu0 0
        %1139 = vperm.xlu0 %1138, %v1011
        %v1140 = vpop.permute.xlu0 %1139
        %1143 = vset.pattern.permute.xlu0 0
        %1144 = vperm.xlu0 %1143, %v1012
        %v1145 = vpop.permute.xlu0 %1144
        %v1147 = vadd.f32 %v1119, %v1130
        %v1148 = vadd.f32 %v1120, %v1130
        %v1149 = vadd.f32 %v1121, %v1135
        %v1150 = vadd.f32 %v1122, %v1135
        %v1151 = vadd.f32 %v1123, %v1140
        %v1152 = vadd.f32 %v1124, %v1140
        %v1153 = vadd.f32 %v1125, %v1145
        %v1154 = vadd.f32 %v1126, %v1145
        %v1155 = vld [vmem:[%s11] sm:$0xff]
        %v1156 = vld [vmem:[%s11 + $0x8] sm:$0xff]
        %v1157 = vld [vmem:[%s11 + $0x10] sm:$0xff]
        %v1158 = vld [vmem:[%s11 + $0x18] sm:$0xff]
        %v1159 = vld [vmem:[%s12] sm:$0xff]
        %v1160 = vld [vmem:[%s12 + $0x8] sm:$0xff]
        %v1161 = vld [vmem:[%s12 + $0x10] sm:$0xff]
        %v1162 = vld [vmem:[%s12 + $0x18] sm:$0xff]
        %1164 = vset.pattern.permute.xlu0 4
        %1165 = vperm.xlu0 %1164, %v1155
        %v1166 = vpop.permute.xlu0 %1165
        %1169 = vset.pattern.permute.xlu0 4
        %1170 = vperm.xlu0 %1169, %v1156
        %v1171 = vpop.permute.xlu0 %1170
        %1174 = vset.pattern.permute.xlu0 4
        %1175 = vperm.xlu0 %1174, %v1157
        %v1176 = vpop.permute.xlu0 %1175
        %1179 = vset.pattern.permute.xlu0 4
        %1180 = vperm.xlu0 %1179, %v1158
        %v1181 = vpop.permute.xlu0 %1180
        %v1183 = vmul.f32 %v1147, %v1166
        %v1184 = vmul.f32 %v1148, %v1166
        %v1185 = vmul.f32 %v1149, %v1171
        %v1186 = vmul.f32 %v1150, %v1171
        %v1187 = vmul.f32 %v1151, %v1176
        %v1188 = vmul.f32 %v1152, %v1176
        %v1189 = vmul.f32 %v1153, %v1181
        %v1190 = vmul.f32 %v1154, %v1181
        %1191 = vrot.lane.b32.xlu0 %v1147, 17
        %v1192 = vpop.permute.xlu0 %1191
        %1193 = vrot.lane.b32.xlu0 %v1149, 17
        %v1194 = vpop.permute.xlu0 %1193
        %1195 = vrot.lane.b32.xlu0 %v1151, 17
        %v1196 = vpop.permute.xlu0 %1195
        %1197 = vrot.lane.b32.xlu0 %v1153, 17
        %v1198 = vpop.permute.xlu0 %1197
        %1199 = vrot.lane.b32.xlu0 %v1148, 17
        %v1200 = vpop.permute.xlu0 %1199
        %1201 = vrot.lane.b32.xlu0 %v1150, 17
        %v1202 = vpop.permute.xlu0 %1201
        %1203 = vrot.lane.b32.xlu0 %v1152, 17
        %v1204 = vpop.permute.xlu0 %1203
        %1205 = vrot.lane.b32.xlu0 %v1154, 17
        %v1206 = vpop.permute.xlu0 %1205
        %v1207 = vsel %vm850, %v1192, %v1200
        %v1208 = vsel %vm850, %v1194, %v1202
        %v1209 = vsel %vm850, %v1196, %v1204
        %v1210 = vsel %vm850, %v1198, %v1206
        %v1211 = vsel %vm850, %v1200, %v1192
        %v1212 = vsel %vm850, %v1202, %v1194
        %v1213 = vsel %vm850, %v1204, %v1196
        %v1214 = vsel %vm850, %v1206, %v1198
        %v1215 = vmul.f32 %v1211, %v853
        %v1216 = vmul.f32 %v1207, %v854
        %v1217 = vmul.f32 %v1212, %v853
        %v1218 = vmul.f32 %v1208, %v854
        %v1219 = vmul.f32 %v1213, %v853
        %v1220 = vmul.f32 %v1209, %v854
        %v1221 = vmul.f32 %v1214, %v853
        %v1222 = vmul.f32 %v1210, %v854
        %1223 = vset.pattern.permute.xlu0 0
        %1224 = vperm.xlu0 %1223, %v1155
        %v1225 = vpop.permute.xlu0 %1224
        %1227 = vset.pattern.permute.xlu0 0
        %1228 = vperm.xlu0 %1227, %v1156
        %v1229 = vpop.permute.xlu0 %1228
        %1231 = vset.pattern.permute.xlu0 0
        %1232 = vperm.xlu0 %1231, %v1157
        %v1233 = vpop.permute.xlu0 %1232
        %1235 = vset.pattern.permute.xlu0 0
        %1236 = vperm.xlu0 %1235, %v1158
        %v1237 = vpop.permute.xlu0 %1236
        %v1239 = vmul.f32 %v1215, %v1225
        %v1240 = vmul.f32 %v1216, %v1225
        %v1241 = vmul.f32 %v1217, %v1229
        %v1242 = vmul.f32 %v1218, %v1229
        %v1243 = vmul.f32 %v1219, %v1233
        %v1244 = vmul.f32 %v1220, %v1233
        %v1245 = vmul.f32 %v1221, %v1237
        %v1246 = vmul.f32 %v1222, %v1237
        %v1247 = vadd.f32 %v1183, %v1239
        %v1248 = vadd.f32 %v1184, %v1240
        %v1249 = vadd.f32 %v1185, %v1241
        %v1250 = vadd.f32 %v1186, %v1242
        %v1251 = vadd.f32 %v1187, %v1243
        %v1252 = vadd.f32 %v1188, %v1244
        %v1253 = vadd.f32 %v1189, %v1245
        %v1254 = vadd.f32 %v1190, %v1246
        %1255 = vrot.lane.b32.xlu0 %v1147, 16
        %v1256 = vpop.permute.xlu0 %1255
        %1257 = vrot.lane.b32.xlu0 %v1149, 16
        %v1258 = vpop.permute.xlu0 %1257
        %1259 = vrot.lane.b32.xlu0 %v1151, 16
        %v1260 = vpop.permute.xlu0 %1259
        %1261 = vrot.lane.b32.xlu0 %v1153, 16
        %v1262 = vpop.permute.xlu0 %1261
        %1263 = vrot.lane.b32.xlu0 %v1148, 16
        %v1264 = vpop.permute.xlu0 %1263
        %1265 = vrot.lane.b32.xlu0 %v1150, 16
        %v1266 = vpop.permute.xlu0 %1265
        %1267 = vrot.lane.b32.xlu0 %v1152, 16
        %v1268 = vpop.permute.xlu0 %1267
        %1269 = vrot.lane.b32.xlu0 %v1154, 16
        %v1270 = vpop.permute.xlu0 %1269
        %v1271 = vsel %vm869, %v1256, %v1264
        %v1272 = vsel %vm869, %v1258, %v1266
        %v1273 = vsel %vm869, %v1260, %v1268
        %v1274 = vsel %vm869, %v1262, %v1270
        %v1275 = vsel %vm869, %v1264, %v1256
        %v1276 = vsel %vm869, %v1266, %v1258
        %v1277 = vsel %vm869, %v1268, %v1260
        %v1278 = vsel %vm869, %v1270, %v1262
        %v1279 = vmul.f32 %v1275, %v872
        %v1280 = vmul.f32 %v1271, %v873
        %v1281 = vmul.f32 %v1276, %v872
        %v1282 = vmul.f32 %v1272, %v873
        %v1283 = vmul.f32 %v1277, %v872
        %v1284 = vmul.f32 %v1273, %v873
        %v1285 = vmul.f32 %v1278, %v872
        %v1286 = vmul.f32 %v1274, %v873
        %1287 = vset.pattern.permute.xlu0 1
        %1288 = vperm.xlu0 %1287, %v1155
        %v1289 = vpop.permute.xlu0 %1288
        %1291 = vset.pattern.permute.xlu0 1
        %1292 = vperm.xlu0 %1291, %v1156
        %v1293 = vpop.permute.xlu0 %1292
        %1295 = vset.pattern.permute.xlu0 1
        %1296 = vperm.xlu0 %1295, %v1157
        %v1297 = vpop.permute.xlu0 %1296
        %1299 = vset.pattern.permute.xlu0 1
        %1300 = vperm.xlu0 %1299, %v1158
        %v1301 = vpop.permute.xlu0 %1300
        %v1303 = vmul.f32 %v1279, %v1289
        %v1304 = vmul.f32 %v1280, %v1289
        %v1305 = vmul.f32 %v1281, %v1293
        %v1306 = vmul.f32 %v1282, %v1293
        %v1307 = vmul.f32 %v1283, %v1297
        %v1308 = vmul.f32 %v1284, %v1297
        %v1309 = vmul.f32 %v1285, %v1301
        %v1310 = vmul.f32 %v1286, %v1301
        %v1311 = vadd.f32 %v1247, %v1303
        %v1312 = vadd.f32 %v1248, %v1304
        %v1313 = vadd.f32 %v1249, %v1305
        %v1314 = vadd.f32 %v1250, %v1306
        %v1315 = vadd.f32 %v1251, %v1307
        %v1316 = vadd.f32 %v1252, %v1308
        %v1317 = vadd.f32 %v1253, %v1309
        %v1318 = vadd.f32 %v1254, %v1310
        %1319 = vrot.lane.b32.xlu0 %v1147, 15
        %v1320 = vpop.permute.xlu0 %1319
        %1321 = vrot.lane.b32.xlu0 %v1149, 15
        %v1322 = vpop.permute.xlu0 %1321
        %1323 = vrot.lane.b32.xlu0 %v1151, 15
        %v1324 = vpop.permute.xlu0 %1323
        %1325 = vrot.lane.b32.xlu0 %v1153, 15
        %v1326 = vpop.permute.xlu0 %1325
        %1327 = vrot.lane.b32.xlu0 %v1148, 15
        %v1328 = vpop.permute.xlu0 %1327
        %1329 = vrot.lane.b32.xlu0 %v1150, 15
        %v1330 = vpop.permute.xlu0 %1329
        %1331 = vrot.lane.b32.xlu0 %v1152, 15
        %v1332 = vpop.permute.xlu0 %1331
        %1333 = vrot.lane.b32.xlu0 %v1154, 15
        %v1334 = vpop.permute.xlu0 %1333
        %v1335 = vsel %vm888, %v1320, %v1328
        %v1336 = vsel %vm888, %v1322, %v1330
        %v1337 = vsel %vm888, %v1324, %v1332
        %v1338 = vsel %vm888, %v1326, %v1334
        %v1339 = vsel %vm888, %v1328, %v1320
        %v1340 = vsel %vm888, %v1330, %v1322
        %v1341 = vsel %vm888, %v1332, %v1324
        %v1342 = vsel %vm888, %v1334, %v1326
        %v1343 = vmul.f32 %v1339, %v891
        %v1344 = vmul.f32 %v1335, %v892
        %v1345 = vmul.f32 %v1340, %v891
        %v1346 = vmul.f32 %v1336, %v892
        %v1347 = vmul.f32 %v1341, %v891
        %v1348 = vmul.f32 %v1337, %v892
        %v1349 = vmul.f32 %v1342, %v891
        %v1350 = vmul.f32 %v1338, %v892
        %1351 = vset.pattern.permute.xlu0 2
        %1352 = vperm.xlu0 %1351, %v1155
        %v1353 = vpop.permute.xlu0 %1352
        %1355 = vset.pattern.permute.xlu0 2
        %1356 = vperm.xlu0 %1355, %v1156
        %v1357 = vpop.permute.xlu0 %1356
        %1359 = vset.pattern.permute.xlu0 2
        %1360 = vperm.xlu0 %1359, %v1157
        %v1361 = vpop.permute.xlu0 %1360
        %1363 = vset.pattern.permute.xlu0 2
        %1364 = vperm.xlu0 %1363, %v1158
        %v1365 = vpop.permute.xlu0 %1364
        %v1367 = vmul.f32 %v1343, %v1353
        %v1368 = vmul.f32 %v1344, %v1353
        %v1369 = vmul.f32 %v1345, %v1357
        %v1370 = vmul.f32 %v1346, %v1357
        %v1371 = vmul.f32 %v1347, %v1361
        %v1372 = vmul.f32 %v1348, %v1361
        %v1373 = vmul.f32 %v1349, %v1365
        %v1374 = vmul.f32 %v1350, %v1365
        %v1375 = vadd.f32 %v1311, %v1367
        %v1376 = vadd.f32 %v1312, %v1368
        %v1377 = vadd.f32 %v1313, %v1369
        %v1378 = vadd.f32 %v1314, %v1370
        %v1379 = vadd.f32 %v1315, %v1371
        %v1380 = vadd.f32 %v1316, %v1372
        %v1381 = vadd.f32 %v1317, %v1373
        %v1382 = vadd.f32 %v1318, %v1374
        %1383 = vrot.lane.b32.xlu0 %v1147, 1
        %v1384 = vpop.permute.xlu0 %1383
        %1385 = vrot.lane.b32.xlu0 %v1149, 1
        %v1386 = vpop.permute.xlu0 %1385
        %1387 = vrot.lane.b32.xlu0 %v1151, 1
        %v1388 = vpop.permute.xlu0 %1387
        %1389 = vrot.lane.b32.xlu0 %v1153, 1
        %v1390 = vpop.permute.xlu0 %1389
        %1391 = vrot.lane.b32.xlu0 %v1148, 1
        %v1392 = vpop.permute.xlu0 %1391
        %1393 = vrot.lane.b32.xlu0 %v1150, 1
        %v1394 = vpop.permute.xlu0 %1393
        %1395 = vrot.lane.b32.xlu0 %v1152, 1
        %v1396 = vpop.permute.xlu0 %1395
        %1397 = vrot.lane.b32.xlu0 %v1154, 1
        %v1398 = vpop.permute.xlu0 %1397
        %v1399 = vsel %vm907, %v1384, %v1392
        %v1400 = vsel %vm907, %v1386, %v1394
        %v1401 = vsel %vm907, %v1388, %v1396
        %v1402 = vsel %vm907, %v1390, %v1398
        %v1403 = vsel %vm907, %v1392, %v1384
        %v1404 = vsel %vm907, %v1394, %v1386
        %v1405 = vsel %vm907, %v1396, %v1388
        %v1406 = vsel %vm907, %v1398, %v1390
        %v1407 = vmul.f32 %v1403, %v910
        %v1408 = vmul.f32 %v1399, %v911
        %v1409 = vmul.f32 %v1404, %v910
        %v1410 = vmul.f32 %v1400, %v911
        %v1411 = vmul.f32 %v1405, %v910
        %v1412 = vmul.f32 %v1401, %v911
        %v1413 = vmul.f32 %v1406, %v910
        %v1414 = vmul.f32 %v1402, %v911
        %1415 = vset.pattern.permute.xlu0 3
        %1416 = vperm.xlu0 %1415, %v1155
        %v1417 = vpop.permute.xlu0 %1416
        %1419 = vset.pattern.permute.xlu0 3
        %1420 = vperm.xlu0 %1419, %v1156
        %v1421 = vpop.permute.xlu0 %1420
        %1423 = vset.pattern.permute.xlu0 3
        %1424 = vperm.xlu0 %1423, %v1157
        %v1425 = vpop.permute.xlu0 %1424
        %1427 = vset.pattern.permute.xlu0 3
        %1428 = vperm.xlu0 %1427, %v1158
        %v1429 = vpop.permute.xlu0 %1428
        %v1431 = vmul.f32 %v1407, %v1417
        %v1432 = vmul.f32 %v1408, %v1417
        %v1433 = vmul.f32 %v1409, %v1421
        %v1434 = vmul.f32 %v1410, %v1421
        %v1435 = vmul.f32 %v1411, %v1425
        %v1436 = vmul.f32 %v1412, %v1425
        %v1437 = vmul.f32 %v1413, %v1429
        %v1438 = vmul.f32 %v1414, %v1429
        %v1439 = vadd.f32 %v1375, %v1431
        %v1440 = vadd.f32 %v1376, %v1432
        %v1441 = vadd.f32 %v1377, %v1433
        %v1442 = vadd.f32 %v1378, %v1434
        %v1443 = vadd.f32 %v1379, %v1435
        %v1444 = vadd.f32 %v1380, %v1436
        %v1445 = vadd.f32 %v1381, %v1437
        %v1446 = vadd.f32 %v1382, %v1438
        %1447 = vrot.lane.b32.xlu0 %v1147, 127
        %v1448 = vpop.permute.xlu0 %1447
        %1449 = vrot.lane.b32.xlu0 %v1149, 127
        %v1450 = vpop.permute.xlu0 %1449
        %1451 = vrot.lane.b32.xlu0 %v1151, 127
        %v1452 = vpop.permute.xlu0 %1451
        %1453 = vrot.lane.b32.xlu0 %v1153, 127
        %v1454 = vpop.permute.xlu0 %1453
        %1455 = vrot.lane.b32.xlu0 %v1148, 127
        %v1456 = vpop.permute.xlu0 %1455
        %1457 = vrot.lane.b32.xlu0 %v1150, 127
        %v1458 = vpop.permute.xlu0 %1457
        %1459 = vrot.lane.b32.xlu0 %v1152, 127
        %v1460 = vpop.permute.xlu0 %1459
        %1461 = vrot.lane.b32.xlu0 %v1154, 127
        %v1462 = vpop.permute.xlu0 %1461
        %v1463 = vsel %vm926, %v1448, %v1456
        %v1464 = vsel %vm926, %v1450, %v1458
        %v1465 = vsel %vm926, %v1452, %v1460
        %v1466 = vsel %vm926, %v1454, %v1462
        %v1467 = vsel %vm926, %v1456, %v1448
        %v1468 = vsel %vm926, %v1458, %v1450
        %v1469 = vsel %vm926, %v1460, %v1452
        %v1470 = vsel %vm926, %v1462, %v1454
        %v1471 = vmul.f32 %v1463, %v929
        %v1472 = vmul.f32 %v1467, %v930
        %v1473 = vmul.f32 %v1464, %v929
        %v1474 = vmul.f32 %v1468, %v930
        %v1475 = vmul.f32 %v1465, %v929
        %v1476 = vmul.f32 %v1469, %v930
        %v1477 = vmul.f32 %v1466, %v929
        %v1478 = vmul.f32 %v1470, %v930
        %1479 = vset.pattern.permute.xlu0 5
        %1480 = vperm.xlu0 %1479, %v1155
        %v1481 = vpop.permute.xlu0 %1480
        %1483 = vset.pattern.permute.xlu0 5
        %1484 = vperm.xlu0 %1483, %v1156
        %v1485 = vpop.permute.xlu0 %1484
        %1487 = vset.pattern.permute.xlu0 5
        %1488 = vperm.xlu0 %1487, %v1157
        %v1489 = vpop.permute.xlu0 %1488
        %1491 = vset.pattern.permute.xlu0 5
        %1492 = vperm.xlu0 %1491, %v1158
        %v1493 = vpop.permute.xlu0 %1492
        %v1495 = vmul.f32 %v1471, %v1481
        %v1496 = vmul.f32 %v1472, %v1481
        %v1497 = vmul.f32 %v1473, %v1485
        %v1498 = vmul.f32 %v1474, %v1485
        %v1499 = vmul.f32 %v1475, %v1489
        %v1500 = vmul.f32 %v1476, %v1489
        %v1501 = vmul.f32 %v1477, %v1493
        %v1502 = vmul.f32 %v1478, %v1493
        %v1503 = vadd.f32 %v1439, %v1495
        %v1504 = vadd.f32 %v1440, %v1496
        %v1505 = vadd.f32 %v1441, %v1497
        %v1506 = vadd.f32 %v1442, %v1498
        %v1507 = vadd.f32 %v1443, %v1499
        %v1508 = vadd.f32 %v1444, %v1500
        %v1509 = vadd.f32 %v1445, %v1501
        %v1510 = vadd.f32 %v1446, %v1502
        %1511 = vrot.lane.b32.xlu0 %v1147, 113
        %v1512 = vpop.permute.xlu0 %1511
        %1513 = vrot.lane.b32.xlu0 %v1149, 113
        %v1514 = vpop.permute.xlu0 %1513
        %1515 = vrot.lane.b32.xlu0 %v1151, 113
        %v1516 = vpop.permute.xlu0 %1515
        %1517 = vrot.lane.b32.xlu0 %v1153, 113
        %v1518 = vpop.permute.xlu0 %1517
        %1519 = vrot.lane.b32.xlu0 %v1148, 113
        %v1520 = vpop.permute.xlu0 %1519
        %1521 = vrot.lane.b32.xlu0 %v1150, 113
        %v1522 = vpop.permute.xlu0 %1521
        %1523 = vrot.lane.b32.xlu0 %v1152, 113
        %v1524 = vpop.permute.xlu0 %1523
        %1525 = vrot.lane.b32.xlu0 %v1154, 113
        %v1526 = vpop.permute.xlu0 %1525
        %v1527 = vsel %vm945, %v1512, %v1520
        %v1528 = vsel %vm945, %v1514, %v1522
        %v1529 = vsel %vm945, %v1516, %v1524
        %v1530 = vsel %vm945, %v1518, %v1526
        %v1531 = vsel %vm945, %v1520, %v1512
        %v1532 = vsel %vm945, %v1522, %v1514
        %v1533 = vsel %vm945, %v1524, %v1516
        %v1534 = vsel %vm945, %v1526, %v1518
        %v1535 = vmul.f32 %v1527, %v948
        %v1536 = vmul.f32 %v1531, %v949
        %v1537 = vmul.f32 %v1528, %v948
        %v1538 = vmul.f32 %v1532, %v949
        %v1539 = vmul.f32 %v1529, %v948
        %v1540 = vmul.f32 %v1533, %v949
        %v1541 = vmul.f32 %v1530, %v948
        %v1542 = vmul.f32 %v1534, %v949
        %1543 = vset.pattern.permute.xlu0 6
        %1544 = vperm.xlu0 %1543, %v1155
        %v1545 = vpop.permute.xlu0 %1544
        %1547 = vset.pattern.permute.xlu0 6
        %1548 = vperm.xlu0 %1547, %v1156
        %v1549 = vpop.permute.xlu0 %1548
        %1551 = vset.pattern.permute.xlu0 6
        %1552 = vperm.xlu0 %1551, %v1157
        %v1553 = vpop.permute.xlu0 %1552
        %1555 = vset.pattern.permute.xlu0 6
        %1556 = vperm.xlu0 %1555, %v1158
        %v1557 = vpop.permute.xlu0 %1556
        %v1559 = vmul.f32 %v1535, %v1545
        %v1560 = vmul.f32 %v1536, %v1545
        %v1561 = vmul.f32 %v1537, %v1549
        %v1562 = vmul.f32 %v1538, %v1549
        %v1563 = vmul.f32 %v1539, %v1553
        %v1564 = vmul.f32 %v1540, %v1553
        %v1565 = vmul.f32 %v1541, %v1557
        %v1566 = vmul.f32 %v1542, %v1557
        %v1567 = vadd.f32 %v1503, %v1559
        %v1568 = vadd.f32 %v1504, %v1560
        %v1569 = vadd.f32 %v1505, %v1561
        %v1570 = vadd.f32 %v1506, %v1562
        %v1571 = vadd.f32 %v1507, %v1563
        %v1572 = vadd.f32 %v1508, %v1564
        %v1573 = vadd.f32 %v1509, %v1565
        %v1574 = vadd.f32 %v1510, %v1566
        %1575 = vrot.lane.b32.xlu0 %v1147, 112
        %v1576 = vpop.permute.xlu0 %1575
        %1577 = vrot.lane.b32.xlu0 %v1149, 112
        %v1578 = vpop.permute.xlu0 %1577
        %1579 = vrot.lane.b32.xlu0 %v1151, 112
        %v1580 = vpop.permute.xlu0 %1579
        %1581 = vrot.lane.b32.xlu0 %v1153, 112
        %v1582 = vpop.permute.xlu0 %1581
        %1583 = vrot.lane.b32.xlu0 %v1148, 112
        %v1584 = vpop.permute.xlu0 %1583
        %1585 = vrot.lane.b32.xlu0 %v1150, 112
        %v1586 = vpop.permute.xlu0 %1585
        %1587 = vrot.lane.b32.xlu0 %v1152, 112
        %v1588 = vpop.permute.xlu0 %1587
        %1589 = vrot.lane.b32.xlu0 %v1154, 112
        %v1590 = vpop.permute.xlu0 %1589
        %v1591 = vsel %vm964, %v1576, %v1584
        %v1592 = vsel %vm964, %v1578, %v1586
        %v1593 = vsel %vm964, %v1580, %v1588
        %v1594 = vsel %vm964, %v1582, %v1590
        %v1595 = vsel %vm964, %v1584, %v1576
        %v1596 = vsel %vm964, %v1586, %v1578
        %v1597 = vsel %vm964, %v1588, %v1580
        %v1598 = vsel %vm964, %v1590, %v1582
        %v1599 = vmul.f32 %v1591, %v967
        %v1600 = vmul.f32 %v1595, %v968
        %v1601 = vmul.f32 %v1592, %v967
        %v1602 = vmul.f32 %v1596, %v968
        %v1603 = vmul.f32 %v1593, %v967
        %v1604 = vmul.f32 %v1597, %v968
        %v1605 = vmul.f32 %v1594, %v967
        %v1606 = vmul.f32 %v1598, %v968
        %1607 = vset.pattern.permute.xlu0 7
        %1608 = vperm.xlu0 %1607, %v1155
        %v1609 = vpop.permute.xlu0 %1608
        %1611 = vset.pattern.permute.xlu0 7
        %1612 = vperm.xlu0 %1611, %v1156
        %v1613 = vpop.permute.xlu0 %1612
        %1615 = vset.pattern.permute.xlu0 7
        %1616 = vperm.xlu0 %1615, %v1157
        %v1617 = vpop.permute.xlu0 %1616
        %1619 = vset.pattern.permute.xlu0 7
        %1620 = vperm.xlu0 %1619, %v1158
        %v1621 = vpop.permute.xlu0 %1620
        %v1623 = vmul.f32 %v1599, %v1609
        %v1624 = vmul.f32 %v1600, %v1609
        %v1625 = vmul.f32 %v1601, %v1613
        %v1626 = vmul.f32 %v1602, %v1613
        %v1627 = vmul.f32 %v1603, %v1617
        %v1628 = vmul.f32 %v1604, %v1617
        %v1629 = vmul.f32 %v1605, %v1621
        %v1630 = vmul.f32 %v1606, %v1621
        %v1631 = vadd.f32 %v1567, %v1623
        %v1632 = vadd.f32 %v1568, %v1624
        %v1633 = vadd.f32 %v1569, %v1625
        %v1634 = vadd.f32 %v1570, %v1626
        %v1635 = vadd.f32 %v1571, %v1627
        %v1636 = vadd.f32 %v1572, %v1628
        %v1637 = vadd.f32 %v1573, %v1629
        %v1638 = vadd.f32 %v1574, %v1630
        %1639 = vrot.lane.b32.xlu0 %v1147, 111
        %v1640 = vpop.permute.xlu0 %1639
        %1641 = vrot.lane.b32.xlu0 %v1149, 111
        %v1642 = vpop.permute.xlu0 %1641
        %1643 = vrot.lane.b32.xlu0 %v1151, 111
        %v1644 = vpop.permute.xlu0 %1643
        %1645 = vrot.lane.b32.xlu0 %v1153, 111
        %v1646 = vpop.permute.xlu0 %1645
        %1647 = vrot.lane.b32.xlu0 %v1148, 111
        %v1648 = vpop.permute.xlu0 %1647
        %1649 = vrot.lane.b32.xlu0 %v1150, 111
        %v1650 = vpop.permute.xlu0 %1649
        %1651 = vrot.lane.b32.xlu0 %v1152, 111
        %v1652 = vpop.permute.xlu0 %1651
        %1653 = vrot.lane.b32.xlu0 %v1154, 111
        %v1654 = vpop.permute.xlu0 %1653
        %v1655 = vsel %vm983, %v1640, %v1648
        %v1656 = vsel %vm983, %v1642, %v1650
        %v1657 = vsel %vm983, %v1644, %v1652
        %v1658 = vsel %vm983, %v1646, %v1654
        %v1659 = vsel %vm983, %v1648, %v1640
        %v1660 = vsel %vm983, %v1650, %v1642
        %v1661 = vsel %vm983, %v1652, %v1644
        %v1662 = vsel %vm983, %v1654, %v1646
        %v1663 = vmul.f32 %v1655, %v986
        %v1664 = vmul.f32 %v1659, %v987
        %v1665 = vmul.f32 %v1656, %v986
        %v1666 = vmul.f32 %v1660, %v987
        %v1667 = vmul.f32 %v1657, %v986
        %v1668 = vmul.f32 %v1661, %v987
        %v1669 = vmul.f32 %v1658, %v986
        %v1670 = vmul.f32 %v1662, %v987
        %1671 = vset.pattern.permute.xlu0 8
        %1672 = vperm.xlu0 %1671, %v1155
        %v1673 = vpop.permute.xlu0 %1672
        %1675 = vset.pattern.permute.xlu0 8
        %1676 = vperm.xlu0 %1675, %v1156
        %v1677 = vpop.permute.xlu0 %1676
        %1679 = vset.pattern.permute.xlu0 8
        %1680 = vperm.xlu0 %1679, %v1157
        %v1681 = vpop.permute.xlu0 %1680
        %1683 = vset.pattern.permute.xlu0 8
        %1684 = vperm.xlu0 %1683, %v1158
        %v1685 = vpop.permute.xlu0 %1684
        %v1687 = vmul.f32 %v1663, %v1673
        %v1688 = vmul.f32 %v1664, %v1673
        %v1689 = vmul.f32 %v1665, %v1677
        %v1690 = vmul.f32 %v1666, %v1677
        %v1691 = vmul.f32 %v1667, %v1681
        %v1692 = vmul.f32 %v1668, %v1681
        %v1693 = vmul.f32 %v1669, %v1685
        %v1694 = vmul.f32 %v1670, %v1685
        %v1695 = vadd.f32 %v1631, %v1687
        %v1696 = vadd.f32 %v1632, %v1688
        %v1697 = vadd.f32 %v1633, %v1689
        %v1698 = vadd.f32 %v1634, %v1690
        %v1699 = vadd.f32 %v1635, %v1691
        %v1700 = vadd.f32 %v1636, %v1692
        %v1701 = vadd.f32 %v1637, %v1693
        %v1702 = vadd.f32 %v1638, %v1694
        %1704 = vset.pattern.permute.xlu0 0
        %1705 = vperm.xlu0 %1704, %v1159
        %v1706 = vpop.permute.xlu0 %1705
        %1709 = vset.pattern.permute.xlu0 0
        %1710 = vperm.xlu0 %1709, %v1160
        %v1711 = vpop.permute.xlu0 %1710
        %1714 = vset.pattern.permute.xlu0 0
        %1715 = vperm.xlu0 %1714, %v1161
        %v1716 = vpop.permute.xlu0 %1715
        %1719 = vset.pattern.permute.xlu0 0
        %1720 = vperm.xlu0 %1719, %v1162
        %v1721 = vpop.permute.xlu0 %1720
        %v1723 = vadd.f32 %v1695, %v1706
        %v1724 = vadd.f32 %v1696, %v1706
        %v1725 = vadd.f32 %v1697, %v1711
        %v1726 = vadd.f32 %v1698, %v1711
        %v1727 = vadd.f32 %v1699, %v1716
        %v1728 = vadd.f32 %v1700, %v1716
        %v1729 = vadd.f32 %v1701, %v1721
        %v1730 = vadd.f32 %v1702, %v1721
        %v1731 = vmul.f32 %v1723, 0.5
        %v1732 = vmul.f32 %v1724, 0.5
        %v1733 = vmul.f32 %v1725, 0.5
        %v1734 = vmul.f32 %v1726, 0.5
        %v1735 = vmul.f32 %v1727, 0.5
        %v1736 = vmul.f32 %v1728, 0.5
        %v1737 = vmul.f32 %v1729, 0.5
        %v1738 = vmul.f32 %v1730, 0.5
        %v1739 = vmul.f32 %v1723, 0.70710677
        %v1740 = vmul.f32 %v1724, 0.70710677
        %v1741 = vmul.f32 %v1725, 0.70710677
        %v1742 = vmul.f32 %v1726, 0.70710677
        %v1743 = vmul.f32 %v1727, 0.70710677
        %v1744 = vmul.f32 %v1728, 0.70710677
        %v1745 = vmul.f32 %v1729, 0.70710677
        %v1746 = vmul.f32 %v1730, 0.70710677
        %v1747 = vmul.f32 %v1739, %v1739
        %v1748 = vmin.f32 16.0, %v1747
        %v1749 = vmul.f32 %v1748, 2.1237322e-06
        %v1750 = vadd.f32 %v1749, 0.00028619796
        %v1751 = vmul.f32 %v1748, %v1750
        %v1752 = vadd.f32 %v1751, 0.0036580483
        %v1753 = vmul.f32 %v1748, %v1752
        %v1754 = vadd.f32 %v1753, 0.05243302
        %v1755 = vmul.f32 %v1748, %v1754
        %v1756 = vadd.f32 %v1755, 0.18741608
        %v1757 = vmul.f32 %v1748, %v1756
        %v1758 = vadd.f32 %v1757, 1.1283791
        %v1759 = vmul.f32 %v1739, %v1758
        %v1760 = vmul.f32 %v1748, 3.8918573e-05
        %v1761 = vadd.f32 %v1760, 0.001143296
        %v1762 = vmul.f32 %v1748, %v1761
        %v1763 = vadd.f32 %v1762, 0.014752088
        %v1764 = vmul.f32 %v1748, %v1763
        %v1765 = vadd.f32 %v1764, 0.112945676
        %v1766 = vmul.f32 %v1748, %v1765
        %v1767 = vadd.f32 %v1766, 0.4994258
        %v1768 = vmul.f32 %v1748, %v1767
        %v1769 = vadd.f32 %v1768, 1.0
        %v1770 = vrcp.pop %v1769
        %v1771 = vmul.f32 %v1769, %v1770
        %v1772 = vsub.f32 1.0, %v1771
        %v1773 = vmul.f32 %v1770, %v1772
        %v1774 = vadd.f32 %v1770, %v1773
        %vm1775 = vweird.f32 %v1769
        %vm1776 = vweird.f32 %v1770
        %vm1777 = vmor %vm1775, %vm1776
        %v1778 = vsel %vm1777, %v1770, %v1774
        %v1779 = vand.u32 2147483647, %v1769
        %vm1780 = vcmp.eq.f32.partialorder %v1779, 8.507059e+37
        %v1781 = vand.u32 %v1769, 2147483648
        %v1782 = vor.u32 1.1754944e-38, %v1781
        %v1783 = vsel %vm1780, %v1782, %v1778
        %v1784 = vmul.f32 %v1759, %v1783
        %v1785 = vmin.f32 %v1784, 1.0
        %v1786 = vmax.f32 %v1785, -1.0
        %v1787 = vmul.f32 %v1740, %v1740
        %v1788 = vmin.f32 16.0, %v1787
        %v1789 = vmul.f32 %v1788, 2.1237322e-06
        %v1790 = vadd.f32 %v1789, 0.00028619796
        %v1791 = vmul.f32 %v1788, %v1790
        %v1792 = vadd.f32 %v1791, 0.0036580483
        %v1793 = vmul.f32 %v1788, %v1792
        %v1794 = vadd.f32 %v1793, 0.05243302
        %v1795 = vmul.f32 %v1788, %v1794
        %v1796 = vadd.f32 %v1795, 0.18741608
        %v1797 = vmul.f32 %v1788, %v1796
        %v1798 = vadd.f32 %v1797, 1.1283791
        %v1799 = vmul.f32 %v1740, %v1798
        %v1800 = vmul.f32 %v1788, 3.8918573e-05
        %v1801 = vadd.f32 %v1800, 0.001143296
        %v1802 = vmul.f32 %v1788, %v1801
        %v1803 = vadd.f32 %v1802, 0.014752088
        %v1804 = vmul.f32 %v1788, %v1803
        %v1805 = vadd.f32 %v1804, 0.112945676
        %v1806 = vmul.f32 %v1788, %v1805
        %v1807 = vadd.f32 %v1806, 0.4994258
        %v1808 = vmul.f32 %v1788, %v1807
        %v1809 = vadd.f32 %v1808, 1.0
        %v1810 = vrcp.pop %v1809
        %v1811 = vmul.f32 %v1809, %v1810
        %v1812 = vsub.f32 1.0, %v1811
        %v1813 = vmul.f32 %v1810, %v1812
        %v1814 = vadd.f32 %v1810, %v1813
        %vm1815 = vweird.f32 %v1809
        %vm1816 = vweird.f32 %v1810
        %vm1817 = vmor %vm1815, %vm1816
        %v1818 = vsel %vm1817, %v1810, %v1814
        %v1819 = vand.u32 2147483647, %v1809
        %vm1820 = vcmp.eq.f32.partialorder %v1819, 8.507059e+37
        %v1821 = vand.u32 %v1809, 2147483648
        %v1822 = vor.u32 1.1754944e-38, %v1821
        %v1823 = vsel %vm1820, %v1822, %v1818
        %v1824 = vmul.f32 %v1799, %v1823
        %v1825 = vmin.f32 %v1824, 1.0
        %v1826 = vmax.f32 %v1825, -1.0
        %v1827 = vmul.f32 %v1741, %v1741
        %v1828 = vmin.f32 16.0, %v1827
        %v1829 = vmul.f32 %v1828, 2.1237322e-06
        %v1830 = vadd.f32 %v1829, 0.00028619796
        %v1831 = vmul.f32 %v1828, %v1830
        %v1832 = vadd.f32 %v1831, 0.0036580483
        %v1833 = vmul.f32 %v1828, %v1832
        %v1834 = vadd.f32 %v1833, 0.05243302
        %v1835 = vmul.f32 %v1828, %v1834
        %v1836 = vadd.f32 %v1835, 0.18741608
        %v1837 = vmul.f32 %v1828, %v1836
        %v1838 = vadd.f32 %v1837, 1.1283791
        %v1839 = vmul.f32 %v1741, %v1838
        %v1840 = vmul.f32 %v1828, 3.8918573e-05
        %v1841 = vadd.f32 %v1840, 0.001143296
        %v1842 = vmul.f32 %v1828, %v1841
        %v1843 = vadd.f32 %v1842, 0.014752088
        %v1844 = vmul.f32 %v1828, %v1843
        %v1845 = vadd.f32 %v1844, 0.112945676
        %v1846 = vmul.f32 %v1828, %v1845
        %v1847 = vadd.f32 %v1846, 0.4994258
        %v1848 = vmul.f32 %v1828, %v1847
        %v1849 = vadd.f32 %v1848, 1.0
        %v1850 = vrcp.pop %v1849
        %v1851 = vmul.f32 %v1849, %v1850
        %v1852 = vsub.f32 1.0, %v1851
        %v1853 = vmul.f32 %v1850, %v1852
        %v1854 = vadd.f32 %v1850, %v1853
        %vm1855 = vweird.f32 %v1849
        %vm1856 = vweird.f32 %v1850
        %vm1857 = vmor %vm1855, %vm1856
        %v1858 = vsel %vm1857, %v1850, %v1854
        %v1859 = vand.u32 2147483647, %v1849
        %vm1860 = vcmp.eq.f32.partialorder %v1859, 8.507059e+37
        %v1861 = vand.u32 %v1849, 2147483648
        %v1862 = vor.u32 1.1754944e-38, %v1861
        %v1863 = vsel %vm1860, %v1862, %v1858
        %v1864 = vmul.f32 %v1839, %v1863
        %v1865 = vmin.f32 %v1864, 1.0
        %v1866 = vmax.f32 %v1865, -1.0
        %v1867 = vmul.f32 %v1742, %v1742
        %v1868 = vmin.f32 16.0, %v1867
        %v1869 = vmul.f32 %v1868, 2.1237322e-06
        %v1870 = vadd.f32 %v1869, 0.00028619796
        %v1871 = vmul.f32 %v1868, %v1870
        %v1872 = vadd.f32 %v1871, 0.0036580483
        %v1873 = vmul.f32 %v1868, %v1872
        %v1874 = vadd.f32 %v1873, 0.05243302
        %v1875 = vmul.f32 %v1868, %v1874
        %v1876 = vadd.f32 %v1875, 0.18741608
        %v1877 = vmul.f32 %v1868, %v1876
        %v1878 = vadd.f32 %v1877, 1.1283791
        %v1879 = vmul.f32 %v1742, %v1878
        %v1880 = vmul.f32 %v1868, 3.8918573e-05
        %v1881 = vadd.f32 %v1880, 0.001143296
        %v1882 = vmul.f32 %v1868, %v1881
        %v1883 = vadd.f32 %v1882, 0.014752088
        %v1884 = vmul.f32 %v1868, %v1883
        %v1885 = vadd.f32 %v1884, 0.112945676
        %v1886 = vmul.f32 %v1868, %v1885
        %v1887 = vadd.f32 %v1886, 0.4994258
        %v1888 = vmul.f32 %v1868, %v1887
        %v1889 = vadd.f32 %v1888, 1.0
        %v1890 = vrcp.pop %v1889
        %v1891 = vmul.f32 %v1889, %v1890
        %v1892 = vsub.f32 1.0, %v1891
        %v1893 = vmul.f32 %v1890, %v1892
        %v1894 = vadd.f32 %v1890, %v1893
        %vm1895 = vweird.f32 %v1889
        %vm1896 = vweird.f32 %v1890
        %vm1897 = vmor %vm1895, %vm1896
        %v1898 = vsel %vm1897, %v1890, %v1894
        %v1899 = vand.u32 2147483647, %v1889
        %vm1900 = vcmp.eq.f32.partialorder %v1899, 8.507059e+37
        %v1901 = vand.u32 %v1889, 2147483648
        %v1902 = vor.u32 1.1754944e-38, %v1901
        %v1903 = vsel %vm1900, %v1902, %v1898
        %v1904 = vmul.f32 %v1879, %v1903
        %v1905 = vmin.f32 %v1904, 1.0
        %v1906 = vmax.f32 %v1905, -1.0
        %v1907 = vmul.f32 %v1743, %v1743
        %v1908 = vmin.f32 16.0, %v1907
        %v1909 = vmul.f32 %v1908, 2.1237322e-06
        %v1910 = vadd.f32 %v1909, 0.00028619796
        %v1911 = vmul.f32 %v1908, %v1910
        %v1912 = vadd.f32 %v1911, 0.0036580483
        %v1913 = vmul.f32 %v1908, %v1912
        %v1914 = vadd.f32 %v1913, 0.05243302
        %v1915 = vmul.f32 %v1908, %v1914
        %v1916 = vadd.f32 %v1915, 0.18741608
        %v1917 = vmul.f32 %v1908, %v1916
        %v1918 = vadd.f32 %v1917, 1.1283791
        %v1919 = vmul.f32 %v1743, %v1918
        %v1920 = vmul.f32 %v1908, 3.8918573e-05
        %v1921 = vadd.f32 %v1920, 0.001143296
        %v1922 = vmul.f32 %v1908, %v1921
        %v1923 = vadd.f32 %v1922, 0.014752088
        %v1924 = vmul.f32 %v1908, %v1923
        %v1925 = vadd.f32 %v1924, 0.112945676
        %v1926 = vmul.f32 %v1908, %v1925
        %v1927 = vadd.f32 %v1926, 0.4994258
        %v1928 = vmul.f32 %v1908, %v1927
        %v1929 = vadd.f32 %v1928, 1.0
        %v1930 = vrcp.pop %v1929
        %v1931 = vmul.f32 %v1929, %v1930
        %v1932 = vsub.f32 1.0, %v1931
        %v1933 = vmul.f32 %v1930, %v1932
        %v1934 = vadd.f32 %v1930, %v1933
        %vm1935 = vweird.f32 %v1929
        %vm1936 = vweird.f32 %v1930
        %vm1937 = vmor %vm1935, %vm1936
        %v1938 = vsel %vm1937, %v1930, %v1934
        %v1939 = vand.u32 2147483647, %v1929
        %vm1940 = vcmp.eq.f32.partialorder %v1939, 8.507059e+37
        %v1941 = vand.u32 %v1929, 2147483648
        %v1942 = vor.u32 1.1754944e-38, %v1941
        %v1943 = vsel %vm1940, %v1942, %v1938
        %v1944 = vmul.f32 %v1919, %v1943
        %v1945 = vmin.f32 %v1944, 1.0
        %v1946 = vmax.f32 %v1945, -1.0
        %v1947 = vmul.f32 %v1744, %v1744
        %v1948 = vmin.f32 16.0, %v1947
        %v1949 = vmul.f32 %v1948, 2.1237322e-06
        %v1950 = vadd.f32 %v1949, 0.00028619796
        %v1951 = vmul.f32 %v1948, %v1950
        %v1952 = vadd.f32 %v1951, 0.0036580483
        %v1953 = vmul.f32 %v1948, %v1952
        %v1954 = vadd.f32 %v1953, 0.05243302
        %v1955 = vmul.f32 %v1948, %v1954
        %v1956 = vadd.f32 %v1955, 0.18741608
        %v1957 = vmul.f32 %v1948, %v1956
        %v1958 = vadd.f32 %v1957, 1.1283791
        %v1959 = vmul.f32 %v1744, %v1958
        %v1960 = vmul.f32 %v1948, 3.8918573e-05
        %v1961 = vadd.f32 %v1960, 0.001143296
        %v1962 = vmul.f32 %v1948, %v1961
        %v1963 = vadd.f32 %v1962, 0.014752088
        %v1964 = vmul.f32 %v1948, %v1963
        %v1965 = vadd.f32 %v1964, 0.112945676
        %v1966 = vmul.f32 %v1948, %v1965
        %v1967 = vadd.f32 %v1966, 0.4994258
        %v1968 = vmul.f32 %v1948, %v1967
        %v1969 = vadd.f32 %v1968, 1.0
        %v1970 = vrcp.pop %v1969
        %v1971 = vmul.f32 %v1969, %v1970
        %v1972 = vsub.f32 1.0, %v1971
        %v1973 = vmul.f32 %v1970, %v1972
        %v1974 = vadd.f32 %v1970, %v1973
        %vm1975 = vweird.f32 %v1969
        %vm1976 = vweird.f32 %v1970
        %vm1977 = vmor %vm1975, %vm1976
        %v1978 = vsel %vm1977, %v1970, %v1974
        %v1979 = vand.u32 2147483647, %v1969
        %vm1980 = vcmp.eq.f32.partialorder %v1979, 8.507059e+37
        %v1981 = vand.u32 %v1969, 2147483648
        %v1982 = vor.u32 1.1754944e-38, %v1981
        %v1983 = vsel %vm1980, %v1982, %v1978
        %v1984 = vmul.f32 %v1959, %v1983
        %v1985 = vmin.f32 %v1984, 1.0
        %v1986 = vmax.f32 %v1985, -1.0
        %v1987 = vmul.f32 %v1745, %v1745
        %v1988 = vmin.f32 16.0, %v1987
        %v1989 = vmul.f32 %v1988, 2.1237322e-06
        %v1990 = vadd.f32 %v1989, 0.00028619796
        %v1991 = vmul.f32 %v1988, %v1990
        %v1992 = vadd.f32 %v1991, 0.0036580483
        %v1993 = vmul.f32 %v1988, %v1992
        %v1994 = vadd.f32 %v1993, 0.05243302
        %v1995 = vmul.f32 %v1988, %v1994
        %v1996 = vadd.f32 %v1995, 0.18741608
        %v1997 = vmul.f32 %v1988, %v1996
        %v1998 = vadd.f32 %v1997, 1.1283791
        %v1999 = vmul.f32 %v1745, %v1998
        %v2000 = vmul.f32 %v1988, 3.8918573e-05
        %v2001 = vadd.f32 %v2000, 0.001143296
        %v2002 = vmul.f32 %v1988, %v2001
        %v2003 = vadd.f32 %v2002, 0.014752088
        %v2004 = vmul.f32 %v1988, %v2003
        %v2005 = vadd.f32 %v2004, 0.112945676
        %v2006 = vmul.f32 %v1988, %v2005
        %v2007 = vadd.f32 %v2006, 0.4994258
        %v2008 = vmul.f32 %v1988, %v2007
        %v2009 = vadd.f32 %v2008, 1.0
        %v2010 = vrcp.pop %v2009
        %v2011 = vmul.f32 %v2009, %v2010
        %v2012 = vsub.f32 1.0, %v2011
        %v2013 = vmul.f32 %v2010, %v2012
        %v2014 = vadd.f32 %v2010, %v2013
        %vm2015 = vweird.f32 %v2009
        %vm2016 = vweird.f32 %v2010
        %vm2017 = vmor %vm2015, %vm2016
        %v2018 = vsel %vm2017, %v2010, %v2014
        %v2019 = vand.u32 2147483647, %v2009
        %vm2020 = vcmp.eq.f32.partialorder %v2019, 8.507059e+37
        %v2021 = vand.u32 %v2009, 2147483648
        %v2022 = vor.u32 1.1754944e-38, %v2021
        %v2023 = vsel %vm2020, %v2022, %v2018
        %v2024 = vmul.f32 %v1999, %v2023
        %v2025 = vmin.f32 %v2024, 1.0
        %v2026 = vmax.f32 %v2025, -1.0
        %v2027 = vmul.f32 %v1746, %v1746
        %v2028 = vmin.f32 16.0, %v2027
        %v2029 = vmul.f32 %v2028, 2.1237322e-06
        %v2030 = vadd.f32 %v2029, 0.00028619796
        %v2031 = vmul.f32 %v2028, %v2030
        %v2032 = vadd.f32 %v2031, 0.0036580483
        %v2033 = vmul.f32 %v2028, %v2032
        %v2034 = vadd.f32 %v2033, 0.05243302
        %v2035 = vmul.f32 %v2028, %v2034
        %v2036 = vadd.f32 %v2035, 0.18741608
        %v2037 = vmul.f32 %v2028, %v2036
        %v2038 = vadd.f32 %v2037, 1.1283791
        %v2039 = vmul.f32 %v1746, %v2038
        %v2040 = vmul.f32 %v2028, 3.8918573e-05
        %v2041 = vadd.f32 %v2040, 0.001143296
        %v2042 = vmul.f32 %v2028, %v2041
        %v2043 = vadd.f32 %v2042, 0.014752088
        %v2044 = vmul.f32 %v2028, %v2043
        %v2045 = vadd.f32 %v2044, 0.112945676
        %v2046 = vmul.f32 %v2028, %v2045
        %v2047 = vadd.f32 %v2046, 0.4994258
        %v2048 = vmul.f32 %v2028, %v2047
        %v2049 = vadd.f32 %v2048, 1.0
        %v2050 = vrcp.pop %v2049
        %v2051 = vmul.f32 %v2049, %v2050
        %v2052 = vsub.f32 1.0, %v2051
        %v2053 = vmul.f32 %v2050, %v2052
        %v2054 = vadd.f32 %v2050, %v2053
        %vm2055 = vweird.f32 %v2049
        %vm2056 = vweird.f32 %v2050
        %vm2057 = vmor %vm2055, %vm2056
        %v2058 = vsel %vm2057, %v2050, %v2054
        %v2059 = vand.u32 2147483647, %v2049
        %vm2060 = vcmp.eq.f32.partialorder %v2059, 8.507059e+37
        %v2061 = vand.u32 %v2049, 2147483648
        %v2062 = vor.u32 1.1754944e-38, %v2061
        %v2063 = vsel %vm2060, %v2062, %v2058
        %v2064 = vmul.f32 %v2039, %v2063
        %v2065 = vmin.f32 %v2064, 1.0
        %v2066 = vmax.f32 %v2065, -1.0
        %v2067 = vadd.f32 %v1786, 1.0
        %v2068 = vadd.f32 %v1826, 1.0
        %v2069 = vadd.f32 %v1866, 1.0
        %v2070 = vadd.f32 %v1906, 1.0
        %v2071 = vadd.f32 %v1946, 1.0
        %v2072 = vadd.f32 %v1986, 1.0
        %v2073 = vadd.f32 %v2026, 1.0
        %v2074 = vadd.f32 %v2066, 1.0
        %v2075 = vmul.f32 %v1731, %v2067
        %v2076 = vmul.f32 %v1732, %v2068
        %v2077 = vmul.f32 %v1733, %v2069
        %v2078 = vmul.f32 %v1734, %v2070
        %v2079 = vmul.f32 %v1735, %v2071
        %v2080 = vmul.f32 %v1736, %v2072
        %v2081 = vmul.f32 %v1737, %v2073
        %v2082 = vmul.f32 %v1738, %v2074
        %v2083 = vld [vmem:[%s13] sm:$0xff]
        %v2084 = vld [vmem:[%s13 + $0x8] sm:$0xff]
        %v2085 = vld [vmem:[%s13 + $0x10] sm:$0xff]
        %v2086 = vld [vmem:[%s14] sm:$0xff]
        %v2087 = vld [vmem:[%s14 + $0x8] sm:$0xff]
        %v2088 = vld [vmem:[%s14 + $0x10] sm:$0xff]
        %2090 = vset.pattern.permute.xlu0 0
        %2091 = vperm.xlu0 %2090, %v2086
        %v2092 = vpop.permute.xlu0 %2091
        %2095 = vset.pattern.permute.xlu0 0
        %2096 = vperm.xlu0 %2095, %v2087
        %v2097 = vpop.permute.xlu0 %2096
        %2100 = vset.pattern.permute.xlu0 0
        %2101 = vperm.xlu0 %2100, %v2088
        %v2102 = vpop.permute.xlu0 %2101
        %vm2104 = vcmask 261120
        %v2106 = vsel %vm2104, %v2083, 0
        %v2109 = vsel %vm2104, %v2084, 0
        %v2112 = vsel %vm2104, %v2085, 0
        %2114 = vmatpush.msra.mxu0 0.0
        %2115 = vmatpush.msra.mxu0 0.0
        %2116 = vmatpush.msra.mxu0 0.0
        %2117 = vmatpush.msra.mxu0 0.0
        %2118 = vmatpush.msra.mxu0 0.0
        %2119 = vmatpush.msra.mxu0 0.0
        %2120 = vmatpush.msra.mxu0 0.0
        %2121 = vmatpush.msra.mxu0 0.0
        %2122 = vmatpush.msra.mxu0 0.0
        %2123 = vmatpush.msra.mxu0 0.0
        %2124 = vmatpush.msra.mxu0 0.0
        %2125 = vmatpush.msra.mxu0 0.0
        %2126 = vmatpush.msra.mxu0 %v2081
        %2127 = vmatpush.msra.mxu0 %v2079
        %2128 = vmatpush.msra.mxu0 %v2077
        %2129 = vmatpush.msra.mxu0 %v2075
        %2130 = vmatmul.f32.gmra.mxu0 %v2106
        %v2131 = vpop.f32.mrf.mxu0
        %v2132 = vadd.f32 %v2092, %v2131
        %2133 = vmatmul.f32.gmra.mxu0 %v2109
        %v2134 = vpop.f32.mrf.mxu0
        %v2135 = vadd.f32 %v2097, %v2134
        %2136 = vmatmul.f32.gmra.mxu0 %v2112
        %v2137 = vpop.f32.mrf.mxu0
        %v2138 = vadd.f32 %v2102, %v2137
        %2139 = vdwg.mxu0
        %2140 = vmatpush.msra.mxu0 0.0
        %2141 = vmatpush.msra.mxu0 0.0
        %2142 = vmatpush.msra.mxu0 0.0
        %2143 = vmatpush.msra.mxu0 0.0
        %2144 = vmatpush.msra.mxu0 0.0
        %2145 = vmatpush.msra.mxu0 0.0
        %2146 = vmatpush.msra.mxu0 0.0
        %2147 = vmatpush.msra.mxu0 0.0
        %2148 = vmatpush.msra.mxu0 0.0
        %2149 = vmatpush.msra.mxu0 0.0
        %2150 = vmatpush.msra.mxu0 0.0
        %2151 = vmatpush.msra.mxu0 0.0
        %2152 = vmatpush.msra.mxu0 %v2082
        %2153 = vmatpush.msra.mxu0 %v2080
        %2154 = vmatpush.msra.mxu0 %v2078
        %2155 = vmatpush.msra.mxu0 %v2076
        %2156 = vmatmul.f32.gmra.mxu0 %v2106
        %v2157 = vpop.f32.mrf.mxu0
        %v2158 = vadd.f32 %v2092, %v2157
        %2159 = vmatmul.f32.gmra.mxu0 %v2109
        %v2160 = vpop.f32.mrf.mxu0
        %v2161 = vadd.f32 %v2097, %v2160
        %2162 = vmatmul.f32.gmra.mxu0 %v2112
        %v2163 = vpop.f32.mrf.mxu0
        %v2164 = vadd.f32 %v2102, %v2163
        %2165 = vdwg.mxu0
        %2166 = vst [vmem:[%s514] sm:$0xff] %v2132
        %2167 = vst [vmem:[%s514 + $0x8] sm:$0xff] %v2158
        %2168 = vst [vmem:[%s514 + $0x10] sm:$0xff] %v2135
        %2169 = vst [vmem:[%s514 + $0x18] sm:$0xff] %v2161
        %2170 = vst [vmem:[%s514 + $0x20] sm:$0xff] %v2138
        %2171 = vst [vmem:[%s514 + $0x28] sm:$0xff] %v2164
        %s2172 = sand.u32 %s360, 1
        %s2173 = scalar_lea.sflag [#allocation4], %s2172
        %s2174 = sand.u32 %s360, 1
        %s2175 = smul.addr %s2174, 48
        %s2176 = scalar_lea.vmem [#allocation5], %s2175
        // Predicated region
        $region85: #{tpu_custom_call.1} parent=79 // pred_check
          %p2177 = pneg %p370
        $region86: #{tpu_custom_call.1} parent=79 // pred_check_branch
          %2179 = sbr.rel (%p2177) target = $region88
        $region87: #{tpu_custom_call.1} parent=79 // pred_region
          %2181 = vsyncadd %s2173, 0
          %s2182 = smul.addr %s32, 6
          %s2183 = smul.addr %s2182, 8
          %s2184 = scalar_lea.hbm %s15, %s2183
          %s2185 = sshll.u32 %s2176, 4
          %s2186 = int_to_ptr.vmem [resolvable:$true] %s2185
          %s2187 = sshll.u32 %s2184, 4
          %s2188 = int_to_ptr.hbm [resolvable:$true] %s2187
          %2193 = dma.vmem_to_hbm [thread:$0]  %s2186, 768, %s2188, %s2173, 256, 256, 16
        $region88: #{tpu_custom_call.1} parent=79 // pred_fallthru
          _
      $region80: #{tpu_custom_call.1} parent=5 // pred_fallthru
        _
      %p2194 = scmp.le.s32.totalorder 2, %s27
      // Predicated region
      $region89: #{tpu_custom_call.1} parent=5 // pred_check
        %p2195 = pneg %p2194
      $region90: #{tpu_custom_call.1} parent=5 // pred_check_branch
        %2197 = sbr.rel (%p2195) target = $region92
      $region91: #{tpu_custom_call.1} parent=5 // pred_region
        %s2198 = ssub.s32 %s27, 2
        // Predicated region
        $region93: #{tpu_custom_call.1} parent=91 // pred_check
          %p2199 = pneg %p376
        $region94: #{tpu_custom_call.1} parent=91 // pred_check_branch
          %2201 = sbr.rel (%p2199) target = $region96
        $region95: #{tpu_custom_call.1} parent=91 // pred_region
          %s2202 = sand.u32 %s361, 1
          %s2203 = scalar_lea.sflag [#allocation4], %s2202
          %s2204 = sand.u32 %s361, 1
          %s2205 = smul.addr %s2204, 48
          %s2206 = scalar_lea.vmem [#allocation5], %s2205
          %2208 = dma.done %s2203, 768
        $region96: #{tpu_custom_call.1} parent=91 // pred_fallthru
          _
      $region92: #{tpu_custom_call.1} parent=5 // pred_fallthru
        _
    $region6: #{tpu_custom_call.1} parent=1 // loop_footer
      %s31 = sadd.s32 1, %s27
    $region7: #{tpu_custom_call.1} parent=1 // loop_footer_branch
      %26 = sbr.rel target = $region3
    $region8: #{tpu_custom_call.1} parent=1 // loop_exit
      _
    %2209 = vsyncpa [#allocation3], 1
    %s2210 = scalar_lea.sflag [#allocation3], 1
    %2211 = vsyncpa %s2210, 1
    %2212 = vsyncpa [#allocation4], 1
    %s2213 = scalar_lea.sflag [#allocation4], 1
    %2214 = vsyncpa %s2213, 1

</llo_original>
